<compile_context>
chip_gen: v5e
topology: v5e:2x2
jax: 0.10.0
libtpu: 0.0.40
codegen_flags: <defaults>
</compile_context>

<pallas_src>
import functools

import jax
import jax.numpy as jnp
from jax.experimental import pallas as pl
from jax.experimental.pallas import tpu as pltpu

# Behaves like -inf through softmax (exp underflows to exactly 0) without inf-inf NaN risk.
# NOTE: a fully-masked row therefore yields a uniform distribution instead of PyTorch's NaNs.
_NEG_LARGE = -1e30
_LANE = 128


def _gumbel_attn_kernel(*refs, tau, scale, use_gumbel, use_mask):
    """refs = (ctx_ref, piv_ref, [noise_ref], [mask_ref], out_ref)

    ctx_ref:   (TB, C, D)  contexts tile
    piv_ref:   (TB, S, D)  pivots tile, pre-transposed so D is on the 128-lane axis
    noise_ref: (TB, S)     U ~ Uniform[0,1)          (only when use_gumbel)
    mask_ref:  (TB, S)     int32, nonzero == masked  (only when use_mask)
    out_ref:   (TB, S)     softmax attention
    """
    ctx_ref, piv_ref = refs[0], refs[1]
    i = 2
    noise_ref = mask_ref = None
    if use_gumbel:
        noise_ref = refs[i]
        i += 1
    if use_mask:
        mask_ref = refs[i]
        i += 1
    out_ref = refs[i]

    C = ctx_ref.shape[1]
    S = piv_ref.shape[1]

    # mean(contexts, dim=1): static unrolled loop over the (small) context window, so no
    # (TB, C, D) f32 temporary is materialized.
    acc = ctx_ref[:, 0, :].astype(jnp.float32)
    for c in range(1, C):
        acc = acc + ctx_ref[:, c, :].astype(jnp.float32)
    mean_ctx = acc * (1.0 / C)                                     # (TB, D)

    # bmm(mean_ctx[:, None, :], pivots): S lane-dense multiply + lane-reduce passes over
    # (TB, D). Per-batch (1,D)x(D,S) MXU matmuls are degenerate and the kernel is
    # HBM-bound; this VPU/XLU formulation also avoids a (TB, D, S) broadcast temporary.
    cols = []
    for s in range(S):
        p_s = piv_ref[:, s, :].astype(jnp.float32)                 # (TB, D)
        cols.append(jnp.sum(mean_ctx * p_s, axis=-1, keepdims=True))
    y = jnp.concatenate(cols, axis=-1)                             # (TB, S)

    if use_gumbel:
        u = noise_ref[...].astype(jnp.float32)
        y = y - scale * jnp.log(-jnp.log(u + 1e-20) + 1e-20)

    if use_mask:
        y = jnp.where(mask_ref[...] != 0, _NEG_LARGE, y)

    # Numerically-stable softmax over the sense axis (== PyTorch dim=1).
    y = y * (1.0 / tau)
    m = jnp.max(y, axis=-1, keepdims=True)
    e = jnp.exp(y - m)
    denom = jnp.sum(e, axis=-1, keepdims=True)
    # One exact divide per (TB, S) tile on an HBM-bound kernel (pl.reciprocal(approx=True)
    # would offload to the EUP but costs bf16 precision for no measurable wall-clock gain).
    out_ref[...] = (e / denom).astype(out_ref.dtype)


def _pick_batch_tile(B, per_row_bytes, vmem_budget_bytes):
    """Largest multiple-of-8 divisor of B whose double-buffered tile fits the VMEM budget,
    capped so the grid keeps >= 2 steps when possible (keeps both v7x TensorCores busy;
    the extra step is ~0.35 us noise on single-TC v5e/v6e)."""
    if B <= 8 or B % 8 != 0:
        return B
    cap = max(8, int(vmem_budget_bytes // max(per_row_bytes, 1)))
    half = (B // 2) - (B // 2) % 8
    if half >= 8:
        cap = min(cap, half)
    cap = min(cap, B)
    tb = cap - cap % 8
    while tb > 8 and B % tb != 0:
        tb -= 8
    return tb if (tb >= 8 and B % tb == 0) else B


def gumbel_sense_attention(pivots, contexts, mask=None, tau=0.5, scale=0.5, *,
                           key=None, batch_tile=None,
                           vmem_budget_bytes=24 * 1024 * 1024,
                           vmem_limit_bytes=48 * 1024 * 1024):
    """pivots: (B, D, S), contexts: (B, C, D), mask: optional (B, S) bool/int.
    Returns the sense-attention softmax, shape (B, S), float32.

    bf16 pivots/contexts are accepted as-is (the kernel accumulates in f32), halving the
    dominant HBM read volume — recommended on bandwidth-starved v5e."""
    B, D, S = pivots.shape
    Bc, C, Dc = contexts.shape
    assert Bc == B and Dc == D, (pivots.shape, contexts.shape)

    use_gumbel = float(scale) > 0.0
    use_mask = mask is not None

    # Layout plumbing: put the embedding dim D on the 128-lane axis for the contraction
    # and a dense (not 8x lane-padded) pivots VMEM block.
    pivots_t = jnp.transpose(pivots, (0, 2, 1))                    # (B, S, D)

    # Size the batch tile against a generation-safe VMEM budget (double-buffered in/out
    # tiles + f32 temporaries per batch row).
    d_pad = pl.cdiv(D, _LANE) * _LANE
    s_pad = pl.cdiv(S, _LANE) * _LANE
    itm_c = jnp.dtype(contexts.dtype).itemsize
    itm_p = jnp.dtype(pivots.dtype).itemsize
    per_row = (2 * (C * d_pad * itm_c + S * d_pad * itm_p
                    + s_pad * 4 * (1 + int(use_gumbel) + int(use_mask)))
               + 4 * (2 * d_pad + 4 * s_pad))
    tb = _pick_batch_tile(B, per_row, vmem_budget_bytes) if batch_tile is None else int(batch_tile)
    assert B % tb == 0, "batch tile must divide the batch"  # TODO(synk): pad ragged batches
    assert tb == B or tb % 8 == 0, "batch tile must be a multiple of 8 (sublane layout)"
    grid = (B // tb,)

    operands = [contexts, pivots_t]
    in_specs = [
        pl.BlockSpec((tb, C, D), lambda i: (i, 0, 0)),             # contexts
        pl.BlockSpec((tb, S, D), lambda i: (i, 0, 0)),             # pivots (transposed)
    ]
    if use_gumbel:
        # Host-side uniforms keep the kernel portable and the result tiling-invariant.
        # TODO(synk): optionally switch to the on-chip PRNG (pltpu.prng_random_bits) when
        # running compiled on hardware and reproducibility across tilings is not needed.
        if key is None:
            key = jax.random.PRNGKey(0)
        u = jax.random.uniform(key, (B, S), dtype=jnp.float32)
        operands.append(u)
        in_specs.append(pl.BlockSpec((tb, S), lambda i: (i, 0)))
    if use_mask:
        assert mask.shape == (B, S)
        operands.append(mask.astype(jnp.int32))
        in_specs.append(pl.BlockSpec((tb, S), lambda i: (i, 0)))

    kernel = functools.partial(_gumbel_attn_kernel, tau=float(tau), scale=float(scale),
                               use_gumbel=use_gumbel, use_mask=use_mask)

    cost = pl.CostEstimate(
        flops=int(2 * B * D * (C + S)),
        transcendentals=int(B * S * (1 + 2 * int(use_gumbel))),
        bytes_accessed=int(B * (C * D * itm_c + S * D * itm_p
                                + S * 4 * (2 + int(use_gumbel) + int(use_mask)))),
    )

    return pl.pallas_call(
        kernel,
        out_shape=jax.ShapeDtypeStruct((B, S), jnp.float32),
        grid=grid,
        in_specs=in_specs,
        out_specs=pl.BlockSpec((tb, S), lambda i: (i, 0)),
        compiler_params=pltpu.CompilerParams(
            dimension_semantics=("parallel",),
            vmem_limit_bytes=int(vmem_limit_bytes),
        ),
        cost_estimate=cost,
    )(*operands)


def _reference(pivots, contexts, mask, tau, scale, u):
    """Plain-JAX mirror of the PyTorch forward (uniform noise supplied explicitly)."""
    mean_ctx = jnp.mean(contexts.astype(jnp.float32), axis=1)                        # (B, D)
    prod = jnp.einsum("bd,bds->bs", mean_ctx, pivots.astype(jnp.float32))            # (B, S)
    y = prod
    if scale > 0.0:
        y = y - scale * jnp.log(-jnp.log(u + 1e-20) + 1e-20)
    if mask is not None:
        y = jnp.where(mask, _NEG_LARGE, y)
    return jax.nn.softmax(y / tau, axis=1)


if __name__ == "__main__":
    B, C, D, S = 64, 6, 128, 16          # batch, context window, embed dim, num senses
    key = jax.random.PRNGKey(0)
    k1, k2 = jax.random.split(key)
    contexts = jax.random.normal(k1, (B, C, D), dtype=jnp.float32)
    pivots = jax.random.normal(k2, (B, D, S), dtype=jnp.float32)
    mask = jnp.broadcast_to(jnp.arange(S)[None, :] >= S - 3, (B, S))   # mask last 3 senses
    tau = 0.5

    # 1) Deterministic path (scale=0 removes the Gumbel noise), masked, explicit small tile.
    out_det = gumbel_sense_attention(pivots, contexts, mask=mask, tau=tau, scale=0.0,
                                     batch_tile=16)
    out_det = jax.block_until_ready(out_det)
    ref_det = _reference(pivots, contexts, mask, tau, 0.0, None)
    assert out_det.shape == (B, S) and out_det.dtype == jnp.float32
    assert jnp.allclose(out_det, ref_det, atol=1e-4, rtol=1e-4)

    # 2) Stochastic path: noise is drawn from a fixed key, so the kernel must match the
    #    plain-JAX reference regardless of the tiling (auto tile selection here).
    nkey = jax.random.PRNGKey(123)
    u = jax.random.uniform(nkey, (B, S), dtype=jnp.float32)
    out = gumbel_sense_attention(pivots, contexts, mask=mask, tau=tau, scale=0.5, key=nkey)
    out = jax.block_until_ready(out)
    ref = _reference(pivots, contexts, mask, tau, 0.5, u)
    assert jnp.allclose(out, ref, atol=1e-4, rtol=1e-4)
    assert bool(jnp.allclose(jnp.sum(out, axis=1), 1.0, atol=1e-4))
    assert bool(jnp.all(jnp.where(mask, out, 0.0) <= 1e-6))   # masked senses get ~0 prob

    # 3) Specialized no-mask path (no dummy mask stream DMA'd).
    out_nm = gumbel_sense_attention(pivots, contexts, mask=None, tau=tau, scale=0.5, key=nkey)
    out_nm = jax.block_until_ready(out_nm)
    ref_nm = _reference(pivots, contexts, None, tau, 0.5, u)
    assert jnp.allclose(out_nm, ref_nm, atol=1e-4, rtol=1e-4)

    print("KERNEL_OK")
</pallas_src>

<mosaic_0001>
module attributes {stable_mosaic.version = 11 : i64} {
  func.func @_gumbel_attn_kernel(%arg0: i32, %arg1: memref<16x6x128xf32, #tpu.memory_space<vmem>>, %arg2: memref<16x16x128xf32, #tpu.memory_space<vmem>>, %arg3: memref<16x16xi32, #tpu.memory_space<vmem>>, %arg4: memref<16x16xf32, #tpu.memory_space<vmem>>) attributes {dimension_semantics = [#tpu.dimension_semantics<parallel>], iteration_bounds = array<i64: 4>, scalar_prefetch = 0 : i64, scratch_operands = 0 : i64, tpu.core_type = #tpu.core_type<tc>, window_params = [{transform_indices = @transform_0, window_bounds = array<i64: 16, 6, 128>}, {transform_indices = @transform_1, window_bounds = array<i64: 16, 16, 128>}, {transform_indices = @transform_2, window_bounds = array<i64: 16, 16>}, {transform_indices = @transform_3, window_bounds = array<i64: 16, 16>}]} {
    %c0 = arith.constant 0 : index
    %c0_0 = arith.constant 0 : index
    %c0_1 = arith.constant 0 : index
    %0 = vector.load %arg1[%c0, %c0_0, %c0_1] : memref<16x6x128xf32, #tpu.memory_space<vmem>>, vector<16x1x128xf32>
    %1 = vector.shape_cast %0 : vector<16x1x128xf32> to vector<16x128xf32>
    %c0_2 = arith.constant 0 : index
    %c1 = arith.constant 1 : index
    %c0_3 = arith.constant 0 : index
    %2 = vector.load %arg1[%c0_2, %c1, %c0_3] : memref<16x6x128xf32, #tpu.memory_space<vmem>>, vector<16x1x128xf32>
    %3 = vector.shape_cast %2 : vector<16x1x128xf32> to vector<16x128xf32>
    %4 = arith.addf %1, %3 : vector<16x128xf32>
    %c0_4 = arith.constant 0 : index
    %c2 = arith.constant 2 : index
    %c0_5 = arith.constant 0 : index
    %5 = vector.load %arg1[%c0_4, %c2, %c0_5] : memref<16x6x128xf32, #tpu.memory_space<vmem>>, vector<16x1x128xf32>
    %6 = vector.shape_cast %5 : vector<16x1x128xf32> to vector<16x128xf32>
    %7 = arith.addf %4, %6 : vector<16x128xf32>
    %c0_6 = arith.constant 0 : index
    %c3 = arith.constant 3 : index
    %c0_7 = arith.constant 0 : index
    %8 = vector.load %arg1[%c0_6, %c3, %c0_7] : memref<16x6x128xf32, #tpu.memory_space<vmem>>, vector<16x1x128xf32>
    %9 = vector.shape_cast %8 : vector<16x1x128xf32> to vector<16x128xf32>
    %10 = arith.addf %7, %9 : vector<16x128xf32>
    %c0_8 = arith.constant 0 : index
    %c4 = arith.constant 4 : index
    %c0_9 = arith.constant 0 : index
    %11 = vector.load %arg1[%c0_8, %c4, %c0_9] : memref<16x6x128xf32, #tpu.memory_space<vmem>>, vector<16x1x128xf32>
    %12 = vector.shape_cast %11 : vector<16x1x128xf32> to vector<16x128xf32>
    %13 = arith.addf %10, %12 : vector<16x128xf32>
    %c0_10 = arith.constant 0 : index
    %c5 = arith.constant 5 : index
    %c0_11 = arith.constant 0 : index
    %14 = vector.load %arg1[%c0_10, %c5, %c0_11] : memref<16x6x128xf32, #tpu.memory_space<vmem>>, vector<16x1x128xf32>
    %15 = vector.shape_cast %14 : vector<16x1x128xf32> to vector<16x128xf32>
    %16 = arith.addf %13, %15 : vector<16x128xf32>
    %cst = arith.constant 0.166666672 : f32
    %17 = vector.broadcast %cst : f32 to vector<16x128xf32>
    %18 = arith.mulf %16, %17 : vector<16x128xf32>
    %c0_12 = arith.constant 0 : index
    %c0_13 = arith.constant 0 : index
    %c0_14 = arith.constant 0 : index
    %19 = vector.load %arg2[%c0_12, %c0_13, %c0_14] : memref<16x16x128xf32, #tpu.memory_space<vmem>>, vector<16x1x128xf32>
    %20 = vector.shape_cast %19 : vector<16x1x128xf32> to vector<16x128xf32>
    %21 = arith.mulf %18, %20 : vector<16x128xf32>
    %cst_15 = arith.constant dense<0.000000e+00> : vector<16xf32>
    %22 = vector.multi_reduction <add>, %21, %cst_15 [1] : vector<16x128xf32> to vector<16xf32>
    %23 = vector.shape_cast %22 : vector<16xf32> to vector<16x1xf32>
    %c0_16 = arith.constant 0 : index
    %c1_17 = arith.constant 1 : index
    %c0_18 = arith.constant 0 : index
    %24 = vector.load %arg2[%c0_16, %c1_17, %c0_18] : memref<16x16x128xf32, #tpu.memory_space<vmem>>, vector<16x1x128xf32>
    %25 = vector.shape_cast %24 : vector<16x1x128xf32> to vector<16x128xf32>
    %26 = arith.mulf %18, %25 : vector<16x128xf32>
    %cst_19 = arith.constant dense<0.000000e+00> : vector<16xf32>
    %27 = vector.multi_reduction <add>, %26, %cst_19 [1] : vector<16x128xf32> to vector<16xf32>
    %28 = vector.shape_cast %27 : vector<16xf32> to vector<16x1xf32>
    %c0_20 = arith.constant 0 : index
    %c2_21 = arith.constant 2 : index
    %c0_22 = arith.constant 0 : index
    %29 = vector.load %arg2[%c0_20, %c2_21, %c0_22] : memref<16x16x128xf32, #tpu.memory_space<vmem>>, vector<16x1x128xf32>
    %30 = vector.shape_cast %29 : vector<16x1x128xf32> to vector<16x128xf32>
    %31 = arith.mulf %18, %30 : vector<16x128xf32>
    %cst_23 = arith.constant dense<0.000000e+00> : vector<16xf32>
    %32 = vector.multi_reduction <add>, %31, %cst_23 [1] : vector<16x128xf32> to vector<16xf32>
    %33 = vector.shape_cast %32 : vector<16xf32> to vector<16x1xf32>
    %c0_24 = arith.constant 0 : index
    %c3_25 = arith.constant 3 : index
    %c0_26 = arith.constant 0 : index
    %34 = vector.load %arg2[%c0_24, %c3_25, %c0_26] : memref<16x16x128xf32, #tpu.memory_space<vmem>>, vector<16x1x128xf32>
    %35 = vector.shape_cast %34 : vector<16x1x128xf32> to vector<16x128xf32>
    %36 = arith.mulf %18, %35 : vector<16x128xf32>
    %cst_27 = arith.constant dense<0.000000e+00> : vector<16xf32>
    %37 = vector.multi_reduction <add>, %36, %cst_27 [1] : vector<16x128xf32> to vector<16xf32>
    %38 = vector.shape_cast %37 : vector<16xf32> to vector<16x1xf32>
    %c0_28 = arith.constant 0 : index
    %c4_29 = arith.constant 4 : index
    %c0_30 = arith.constant 0 : index
    %39 = vector.load %arg2[%c0_28, %c4_29, %c0_30] : memref<16x16x128xf32, #tpu.memory_space<vmem>>, vector<16x1x128xf32>
    %40 = vector.shape_cast %39 : vector<16x1x128xf32> to vector<16x128xf32>
    %41 = arith.mulf %18, %40 : vector<16x128xf32>
    %cst_31 = arith.constant dense<0.000000e+00> : vector<16xf32>
    %42 = vector.multi_reduction <add>, %41, %cst_31 [1] : vector<16x128xf32> to vector<16xf32>
    %43 = vector.shape_cast %42 : vector<16xf32> to vector<16x1xf32>
    %c0_32 = arith.constant 0 : index
    %c5_33 = arith.constant 5 : index
    %c0_34 = arith.constant 0 : index
    %44 = vector.load %arg2[%c0_32, %c5_33, %c0_34] : memref<16x16x128xf32, #tpu.memory_space<vmem>>, vector<16x1x128xf32>
    %45 = vector.shape_cast %44 : vector<16x1x128xf32> to vector<16x128xf32>
    %46 = arith.mulf %18, %45 : vector<16x128xf32>
    %cst_35 = arith.constant dense<0.000000e+00> : vector<16xf32>
    %47 = vector.multi_reduction <add>, %46, %cst_35 [1] : vector<16x128xf32> to vector<16xf32>
    %48 = vector.shape_cast %47 : vector<16xf32> to vector<16x1xf32>
    %c0_36 = arith.constant 0 : index
    %c6 = arith.constant 6 : index
    %c0_37 = arith.constant 0 : index
    %49 = vector.load %arg2[%c0_36, %c6, %c0_37] : memref<16x16x128xf32, #tpu.memory_space<vmem>>, vector<16x1x128xf32>
    %50 = vector.shape_cast %49 : vector<16x1x128xf32> to vector<16x128xf32>
    %51 = arith.mulf %18, %50 : vector<16x128xf32>
    %cst_38 = arith.constant dense<0.000000e+00> : vector<16xf32>
    %52 = vector.multi_reduction <add>, %51, %cst_38 [1] : vector<16x128xf32> to vector<16xf32>
    %53 = vector.shape_cast %52 : vector<16xf32> to vector<16x1xf32>
    %c0_39 = arith.constant 0 : index
    %c7 = arith.constant 7 : index
    %c0_40 = arith.constant 0 : index
    %54 = vector.load %arg2[%c0_39, %c7, %c0_40] : memref<16x16x128xf32, #tpu.memory_space<vmem>>, vector<16x1x128xf32>
    %55 = vector.shape_cast %54 : vector<16x1x128xf32> to vector<16x128xf32>
    %56 = arith.mulf %18, %55 : vector<16x128xf32>
    %cst_41 = arith.constant dense<0.000000e+00> : vector<16xf32>
    %57 = vector.multi_reduction <add>, %56, %cst_41 [1] : vector<16x128xf32> to vector<16xf32>
    %58 = vector.shape_cast %57 : vector<16xf32> to vector<16x1xf32>
    %c0_42 = arith.constant 0 : index
    %c8 = arith.constant 8 : index
    %c0_43 = arith.constant 0 : index
    %59 = vector.load %arg2[%c0_42, %c8, %c0_43] : memref<16x16x128xf32, #tpu.memory_space<vmem>>, vector<16x1x128xf32>
    %60 = vector.shape_cast %59 : vector<16x1x128xf32> to vector<16x128xf32>
    %61 = arith.mulf %18, %60 : vector<16x128xf32>
    %cst_44 = arith.constant dense<0.000000e+00> : vector<16xf32>
    %62 = vector.multi_reduction <add>, %61, %cst_44 [1] : vector<16x128xf32> to vector<16xf32>
    %63 = vector.shape_cast %62 : vector<16xf32> to vector<16x1xf32>
    %c0_45 = arith.constant 0 : index
    %c9 = arith.constant 9 : index
    %c0_46 = arith.constant 0 : index
    %64 = vector.load %arg2[%c0_45, %c9, %c0_46] : memref<16x16x128xf32, #tpu.memory_space<vmem>>, vector<16x1x128xf32>
    %65 = vector.shape_cast %64 : vector<16x1x128xf32> to vector<16x128xf32>
    %66 = arith.mulf %18, %65 : vector<16x128xf32>
    %cst_47 = arith.constant dense<0.000000e+00> : vector<16xf32>
    %67 = vector.multi_reduction <add>, %66, %cst_47 [1] : vector<16x128xf32> to vector<16xf32>
    %68 = vector.shape_cast %67 : vector<16xf32> to vector<16x1xf32>
    %c0_48 = arith.constant 0 : index
    %c10 = arith.constant 10 : index
    %c0_49 = arith.constant 0 : index
    %69 = vector.load %arg2[%c0_48, %c10, %c0_49] : memref<16x16x128xf32, #tpu.memory_space<vmem>>, vector<16x1x128xf32>
    %70 = vector.shape_cast %69 : vector<16x1x128xf32> to vector<16x128xf32>
    %71 = arith.mulf %18, %70 : vector<16x128xf32>
    %cst_50 = arith.constant dense<0.000000e+00> : vector<16xf32>
    %72 = vector.multi_reduction <add>, %71, %cst_50 [1] : vector<16x128xf32> to vector<16xf32>
    %73 = vector.shape_cast %72 : vector<16xf32> to vector<16x1xf32>
    %c0_51 = arith.constant 0 : index
    %c11 = arith.constant 11 : index
    %c0_52 = arith.constant 0 : index
    %74 = vector.load %arg2[%c0_51, %c11, %c0_52] : memref<16x16x128xf32, #tpu.memory_space<vmem>>, vector<16x1x128xf32>
    %75 = vector.shape_cast %74 : vector<16x1x128xf32> to vector<16x128xf32>
    %76 = arith.mulf %18, %75 : vector<16x128xf32>
    %cst_53 = arith.constant dense<0.000000e+00> : vector<16xf32>
    %77 = vector.multi_reduction <add>, %76, %cst_53 [1] : vector<16x128xf32> to vector<16xf32>
    %78 = vector.shape_cast %77 : vector<16xf32> to vector<16x1xf32>
    %c0_54 = arith.constant 0 : index
    %c12 = arith.constant 12 : index
    %c0_55 = arith.constant 0 : index
    %79 = vector.load %arg2[%c0_54, %c12, %c0_55] : memref<16x16x128xf32, #tpu.memory_space<vmem>>, vector<16x1x128xf32>
    %80 = vector.shape_cast %79 : vector<16x1x128xf32> to vector<16x128xf32>
    %81 = arith.mulf %18, %80 : vector<16x128xf32>
    %cst_56 = arith.constant dense<0.000000e+00> : vector<16xf32>
    %82 = vector.multi_reduction <add>, %81, %cst_56 [1] : vector<16x128xf32> to vector<16xf32>
    %83 = vector.shape_cast %82 : vector<16xf32> to vector<16x1xf32>
    %c0_57 = arith.constant 0 : index
    %c13 = arith.constant 13 : index
    %c0_58 = arith.constant 0 : index
    %84 = vector.load %arg2[%c0_57, %c13, %c0_58] : memref<16x16x128xf32, #tpu.memory_space<vmem>>, vector<16x1x128xf32>
    %85 = vector.shape_cast %84 : vector<16x1x128xf32> to vector<16x128xf32>
    %86 = arith.mulf %18, %85 : vector<16x128xf32>
    %cst_59 = arith.constant dense<0.000000e+00> : vector<16xf32>
    %87 = vector.multi_reduction <add>, %86, %cst_59 [1] : vector<16x128xf32> to vector<16xf32>
    %88 = vector.shape_cast %87 : vector<16xf32> to vector<16x1xf32>
    %c0_60 = arith.constant 0 : index
    %c14 = arith.constant 14 : index
    %c0_61 = arith.constant 0 : index
    %89 = vector.load %arg2[%c0_60, %c14, %c0_61] : memref<16x16x128xf32, #tpu.memory_space<vmem>>, vector<16x1x128xf32>
    %90 = vector.shape_cast %89 : vector<16x1x128xf32> to vector<16x128xf32>
    %91 = arith.mulf %18, %90 : vector<16x128xf32>
    %cst_62 = arith.constant dense<0.000000e+00> : vector<16xf32>
    %92 = vector.multi_reduction <add>, %91, %cst_62 [1] : vector<16x128xf32> to vector<16xf32>
    %93 = vector.shape_cast %92 : vector<16xf32> to vector<16x1xf32>
    %c0_63 = arith.constant 0 : index
    %c15 = arith.constant 15 : index
    %c0_64 = arith.constant 0 : index
    %94 = vector.load %arg2[%c0_63, %c15, %c0_64] : memref<16x16x128xf32, #tpu.memory_space<vmem>>, vector<16x1x128xf32>
    %95 = vector.shape_cast %94 : vector<16x1x128xf32> to vector<16x128xf32>
    %96 = arith.mulf %18, %95 : vector<16x128xf32>
    %cst_65 = arith.constant dense<0.000000e+00> : vector<16xf32>
    %97 = vector.multi_reduction <add>, %96, %cst_65 [1] : vector<16x128xf32> to vector<16xf32>
    %98 = vector.shape_cast %97 : vector<16xf32> to vector<16x1xf32>
    %99 = tpu.concatenate %23, %28, %33, %38, %43, %48, %53, %58, %63, %68, %73, %78, %83, %88, %93, %98 in 1 : vector<16x1xf32>, vector<16x1xf32>, vector<16x1xf32>, vector<16x1xf32>, vector<16x1xf32>, vector<16x1xf32>, vector<16x1xf32>, vector<16x1xf32>, vector<16x1xf32>, vector<16x1xf32>, vector<16x1xf32>, vector<16x1xf32>, vector<16x1xf32>, vector<16x1xf32>, vector<16x1xf32>, vector<16x1xf32> -> vector<16x16xf32>
    %c0_66 = arith.constant 0 : index
    %c0_67 = arith.constant 0 : index
    %100 = vector.load %arg3[%c0_66, %c0_67] : memref<16x16xi32, #tpu.memory_space<vmem>>, vector<16x16xi32>
    %c0_i32 = arith.constant 0 : i32
    %101 = vector.broadcast %c0_i32 : i32 to vector<16x16xi32>
    %102 = arith.cmpi ne, %100, %101 : vector<16x16xi32>
    %cst_68 = arith.constant -1.000000e+30 : f32
    %103 = vector.broadcast %cst_68 : f32 to vector<16x16xf32>
    %104 = arith.select %102, %103, %99 : vector<16x16xi1>, vector<16x16xf32>
    %cst_69 = arith.constant 2.000000e+00 : f32
    %105 = vector.broadcast %cst_69 : f32 to vector<16x16xf32>
    %106 = arith.mulf %104, %105 : vector<16x16xf32>
    %cst_70 = arith.constant dense<0xFF800000> : vector<16xf32>
    %107 = vector.multi_reduction <maximumf>, %106, %cst_70 [1] : vector<16x16xf32> to vector<16xf32>
    %108 = vector.shape_cast %107 : vector<16xf32> to vector<16x1xf32>
    %109 = vector.broadcast %108 : vector<16x1xf32> to vector<16x16xf32>
    %110 = arith.subf %106, %109 : vector<16x16xf32>
    %111 = math.exp %110 : vector<16x16xf32>
    %cst_71 = arith.constant dense<0.000000e+00> : vector<16xf32>
    %112 = vector.multi_reduction <add>, %111, %cst_71 [1] : vector<16x16xf32> to vector<16xf32>
    %113 = vector.shape_cast %112 : vector<16xf32> to vector<16x1xf32>
    %114 = vector.broadcast %113 : vector<16x1xf32> to vector<16x16xf32>
    %115 = arith.divf %111, %114 : vector<16x16xf32>
    %c0_72 = arith.constant 0 : index
    %c0_73 = arith.constant 0 : index
    %116 = vector.load %arg4[%c0_72, %c0_73] : memref<16x16xf32, #tpu.memory_space<vmem>>, vector<16x16xf32>
    tpu.vector_store %arg4[%c0_72, %c0_73], %115 {strides = array<i32>} : memref<16x16xf32, #tpu.memory_space<vmem>>, vector<16x16xf32>,
    return
  }
  func.func @transform_0(%arg0: i32) -> (i32, i32, i32) {
    %c0_i32 = arith.constant 0 : i32
    %c0_i32_0 = arith.constant 0 : i32
    %c0_i32_1 = arith.constant 0 : i32
    return %arg0, %c0_i32, %c0_i32_0 : i32, i32, i32
  }
  func.func @transform_1(%arg0: i32) -> (i32, i32, i32) {
    %c0_i32 = arith.constant 0 : i32
    %c0_i32_0 = arith.constant 0 : i32
    %c0_i32_1 = arith.constant 0 : i32
    return %arg0, %c0_i32, %c0_i32_0 : i32, i32, i32
  }
  func.func @transform_2(%arg0: i32) -> (i32, i32) {
    %c0_i32 = arith.constant 0 : i32
    %c0_i32_0 = arith.constant 0 : i32
    return %arg0, %c0_i32 : i32, i32
  }
  func.func @transform_3(%arg0: i32) -> (i32, i32) {
    %c0_i32 = arith.constant 0 : i32
    %c0_i32_0 = arith.constant 0 : i32
    return %arg0, %c0_i32 : i32, i32
  }
}

</mosaic_0001>

<llo_original>
// kernel: tpu_custom_call.1
$region0: #{tpu_custom_call.1}
  #allocation0 [shape = 'u32[]', space=smem, size = 0x4, offset = 0x4, fixed_abs, tag = 'smem constant byte address 0x4 - core index']
  #allocation1 [shape = 'u32[72,128]{1,0:T(1,128)}', space=vmem, size = 0x9000, scoped, tag = 'internal scratch']
  %s0 = inlined_call_operand.vmem [shape: f32[64,6,128], index: 0, kind: input, shape index: {}]
  %s1 = inlined_call_operand.hbm [shape: f32[64,16,128], index: 1, kind: input, shape index: {}]
  %s2 = inlined_call_operand.vmem [shape: s32[64,16], index: 2, kind: input, shape index: {}]
  %s3 = inlined_call_operand.vmem [shape: f32[64,16], index: 3, kind: output, shape index: {}]
  %s4 = sld [smem:[#allocation0]]
  $region49: #{tpu_custom_call.1} parent=0
    _
  %s6 = ssub.s32 1, %s4
  %s7 = scalar_select 0, %s6, %s4
  $region1: #{tpu_custom_call.1} parent=0
    #allocation2 [shape = 'u8[262144]{0}', space=vmem, size = 0x40000, scoped, tag = 'input window, operand 1']
    #allocation3 [shape = 's32[2]{0}', space=sflag, size = 0x8, scoped, tag = 'scoped memory for tpu_custom_call.1']
    %8 = vsyncpa [#allocation3], 0
    %s9 = scalar_lea.sflag [#allocation3], 1
    %10 = vsyncpa %s9, 0
    loop: start=0, step=1, limit=6
    $region2: #{tpu_custom_call.1} parent=1 // loop_pre_header
      _
    $region3: #{tpu_custom_call.1} parent=1 // loop_header
      %s12 = sphi 0, %s16
      %p13 = scmp.ge.s32.totalorder %s12, 6
      %s22 = sphi 0, %s24
      %s25 = sphi 0, %s22
      %s26 = sphi 0, %s25
      %s42 = sphi 0, %s26
      %s48 = sphi 0, %s50
      %s51 = sphi 0, %s48
      %s52 = sphi 0, %s51
      %s68 = sphi 0, %s52
      %s74 = sphi 0, %s76
      %s77 = sphi 0, %s74
      %s78 = sphi 0, %s77
      %s94 = sphi 0, %s78
      %s100 = sphi 0, %s102
      %s103 = sphi 0, %s100
      %s104 = sphi 0, %s103
      %s120 = sphi 0, %s104
    $region4: #{tpu_custom_call.1} parent=1 // loop_header_branch
      %15 = sbr.rel (%p13) target = $region8
    $region5: #{tpu_custom_call.1} parent=1 // loop_body
      %s17 = ssub.s32 %s12, 1
      %s18 = ssub.s32 %s12, 2
      %s19 = sadd.s32 %s12, 1
      %s20 = ssub.s32 %s12, %s19
      %p21 = scmp.eq.s32.totalorder %s20, 0
      %s23 = sadd.s32 %s22, 1
      %s24 = scalar_select %p21, %s22, %s23
      %p27 = pneg %p21
      %p28 = scmp.eq.s32.totalorder %s12, 3
      %p29 = por %p27, %p28
      %p30 = scmp.ne.s32.totalorder %s22, %s25
      %p31 = scmp.eq.s32.totalorder %s12, 0
      %p32 = por %p30, %p31
      %p33 = scmp.ne.s32.totalorder %s22, %s25
      %p34 = scmp.eq.s32.totalorder %s17, 3
      %p35 = por %p33, %p34
      %p36 = scmp.ne.s32.totalorder %s25, %s26
      %p37 = scmp.eq.s32.totalorder %s17, 0
      %p38 = por %p36, %p37
      %p39 = scmp.ne.s32.totalorder %s25, %s26
      %p40 = scmp.eq.s32.totalorder %s18, 3
      %p41 = por %p39, %p40
      %p43 = scmp.ne.s32.totalorder %s26, %s42
      %p44 = scmp.eq.s32.totalorder %s18, 0
      %p45 = por %p43, %p44
      %s46 = ssub.s32 %s12, %s19
      %p47 = scmp.eq.s32.totalorder %s46, 0
      %s49 = sadd.s32 %s48, 1
      %s50 = scalar_select %p47, %s48, %s49
      %p53 = pneg %p47
      %p54 = scmp.eq.s32.totalorder %s12, 3
      %p55 = por %p53, %p54
      %p56 = scmp.ne.s32.totalorder %s48, %s51
      %p57 = scmp.eq.s32.totalorder %s12, 0
      %p58 = por %p56, %p57
      %p59 = scmp.ne.s32.totalorder %s48, %s51
      %p60 = scmp.eq.s32.totalorder %s17, 3
      %p61 = por %p59, %p60
      %p62 = scmp.ne.s32.totalorder %s51, %s52
      %p63 = scmp.eq.s32.totalorder %s17, 0
      %p64 = por %p62, %p63
      %p65 = scmp.ne.s32.totalorder %s51, %s52
      %p66 = scmp.eq.s32.totalorder %s18, 3
      %p67 = por %p65, %p66
      %p69 = scmp.ne.s32.totalorder %s52, %s68
      %p70 = scmp.eq.s32.totalorder %s18, 0
      %p71 = por %p69, %p70
      %s72 = ssub.s32 %s12, %s19
      %p73 = scmp.eq.s32.totalorder %s72, 0
      %s75 = sadd.s32 %s74, 1
      %s76 = scalar_select %p73, %s74, %s75
      %p79 = pneg %p73
      %p80 = scmp.eq.s32.totalorder %s12, 3
      %p81 = por %p79, %p80
      %p82 = scmp.ne.s32.totalorder %s74, %s77
      %p83 = scmp.eq.s32.totalorder %s12, 0
      %p84 = por %p82, %p83
      %p85 = scmp.ne.s32.totalorder %s74, %s77
      %p86 = scmp.eq.s32.totalorder %s17, 3
      %p87 = por %p85, %p86
      %p88 = scmp.ne.s32.totalorder %s77, %s78
      %p89 = scmp.eq.s32.totalorder %s17, 0
      %p90 = por %p88, %p89
      %p91 = scmp.ne.s32.totalorder %s77, %s78
      %p92 = scmp.eq.s32.totalorder %s18, 3
      %p93 = por %p91, %p92
      %p95 = scmp.ne.s32.totalorder %s78, %s94
      %p96 = scmp.eq.s32.totalorder %s18, 0
      %p97 = por %p95, %p96
      %s98 = ssub.s32 %s12, %s19
      %p99 = scmp.eq.s32.totalorder %s98, 0
      %s101 = sadd.s32 %s100, 1
      %s102 = scalar_select %p99, %s100, %s101
      %p105 = pneg %p99
      %p106 = scmp.eq.s32.totalorder %s12, 3
      %p107 = por %p105, %p106
      %p108 = scmp.ne.s32.totalorder %s100, %s103
      %p109 = scmp.eq.s32.totalorder %s12, 0
      %p110 = por %p108, %p109
      %p111 = scmp.ne.s32.totalorder %s100, %s103
      %p112 = scmp.eq.s32.totalorder %s17, 3
      %p113 = por %p111, %p112
      %p114 = scmp.ne.s32.totalorder %s103, %s104
      %p115 = scmp.eq.s32.totalorder %s17, 0
      %p116 = por %p114, %p115
      %p117 = scmp.ne.s32.totalorder %s103, %s104
      %p118 = scmp.eq.s32.totalorder %s18, 3
      %p119 = por %p117, %p118
      %p121 = scmp.ne.s32.totalorder %s104, %s120
      %p122 = scmp.eq.s32.totalorder %s18, 0
      %p123 = por %p121, %p122
      %p124 = scmp.le.s32.totalorder 1, %s12
      %p125 = scmp.lt.s32.totalorder %s12, 5
      %p126 = pnand %p124, %p125
      %p127 = pneg %p126
      // Predicated region
      $region9: #{tpu_custom_call.1} parent=5 // pred_check
        _
      $region10: #{tpu_custom_call.1} parent=5 // pred_check_branch
        %129 = sbr.rel (%p126) target = $region12
      $region11: #{tpu_custom_call.1} parent=5 // pred_region
        %s130 = ssub.s32 %s12, 1
      $region12: #{tpu_custom_call.1} parent=5 // pred_fallthru
        _
      %p131 = scmp.lt.s32.totalorder %s12, 4
      // Predicated region
      $region13: #{tpu_custom_call.1} parent=5 // pred_check
        %p132 = pneg %p131
      $region14: #{tpu_custom_call.1} parent=5 // pred_check_branch
        %134 = sbr.rel (%p132) target = $region16
      $region15: #{tpu_custom_call.1} parent=5 // pred_region
        // Predicated region
        $region17: #{tpu_custom_call.1} parent=15 // pred_check
          %p135 = pneg %p32
        $region18: #{tpu_custom_call.1} parent=15 // pred_check_branch
          %137 = sbr.rel (%p135) target = $region20
        $region19: #{tpu_custom_call.1} parent=15 // pred_region
          %s138 = smul.u32 16, %s12
          %p139 = scmp.lt.s32.totalorder %s138, 63
          %s140 = scalar_select %p139, %s138, 63
          %s141 = smul.addr %s140, 8
          %s142 = scalar_lea.vmem %s0, %s141
          %s143 = smul.u32 16, %s12
        $region20: #{tpu_custom_call.1} parent=15 // pred_fallthru
          _
        // Predicated region
        $region21: #{tpu_custom_call.1} parent=15 // pred_check
          %p144 = pneg %p58
        $region22: #{tpu_custom_call.1} parent=15 // pred_check_branch
          %146 = sbr.rel (%p144) target = $region24
        $region23: #{tpu_custom_call.1} parent=15 // pred_region
          %s147 = sand.u32 %s48, 1
          %s148 = scalar_lea.sflag [#allocation3], %s147
          %s149 = sand.u32 %s48, 1
          %s150 = smul.addr %s149, 256
          %s151 = scalar_lea.vmem [#allocation2], %s150
          %s152 = smul.u32 16, %s12
          %154 = vsyncadd %s148, 0
          %s155 = smul.addr %s152, 2
          %s156 = smul.addr %s155, 8
          %s157 = scalar_lea.hbm %s1, %s156
          %s158 = sshll.u32 %s157, 4
          %s159 = int_to_ptr.hbm [resolvable:$true] %s158
          %s160 = sshll.u32 %s151, 4
          %s161 = int_to_ptr.vmem [resolvable:$true] %s160
          %166 = dma.hbm_to_vmem [thread:$0]  %s159, 4096, %s161, %s148, 128, 128, 8
        $region24: #{tpu_custom_call.1} parent=15 // pred_fallthru
          _
        // Predicated region
        $region25: #{tpu_custom_call.1} parent=15 // pred_check
          %p167 = pneg %p84
        $region26: #{tpu_custom_call.1} parent=15 // pred_check_branch
          %169 = sbr.rel (%p167) target = $region28
        $region27: #{tpu_custom_call.1} parent=15 // pred_region
          %s170 = smul.u32 2, %s12
          %p171 = scmp.lt.s32.totalorder %s170, 7
          %s172 = scalar_select %p171, %s170, 7
          %s173 = smul.addr %s172, 8
          %s174 = scalar_lea.vmem %s2, %s173
          %s175 = smul.u32 2, %s12
        $region28: #{tpu_custom_call.1} parent=15 // pred_fallthru
          _
      $region16: #{tpu_custom_call.1} parent=5 // pred_fallthru
        _
      %p176 = scmp.le.s32.totalorder 1, %s12
      %p177 = scmp.lt.s32.totalorder %s12, 5
      %p178 = pnand %p176, %p177
      %p179 = pneg %p178
      // Predicated region
      $region29: #{tpu_custom_call.1} parent=5 // pred_check
        _
      $region30: #{tpu_custom_call.1} parent=5 // pred_check_branch
        %181 = sbr.rel (%p178) target = $region32
      $region31: #{tpu_custom_call.1} parent=5 // pred_region
        %s182 = ssub.s32 %s12, 1
        %s183 = sand.u32 %s51, 1
        %s184 = scalar_lea.sflag [#allocation3], %s183
        %s185 = sand.u32 %s51, 1
        %s186 = smul.addr %s185, 256
        %s187 = scalar_lea.vmem [#allocation2], %s186
        // Predicated region
        $region33: #{tpu_custom_call.1} parent=31 // pred_check
          %p188 = pneg %p64
        $region34: #{tpu_custom_call.1} parent=31 // pred_check_branch
          %190 = sbr.rel (%p188) target = $region36
        $region35: #{tpu_custom_call.1} parent=31 // pred_region
          %192 = dma.done %s184, 4096
        $region36: #{tpu_custom_call.1} parent=31 // pred_fallthru
          _
        %s193 = smul.u32 16, %s17
        %p194 = scmp.lt.s32.totalorder %s193, 63
        %s195 = scalar_select %p194, %s193, 63
        %s196 = smul.addr %s195, 8
        %s197 = scalar_lea.vmem %s0, %s196
        %p198 = pneg %p38
        %p199 = pneg %p35
        %s200 = sand.u32 %s51, 1
        %s201 = scalar_lea.sflag [#allocation3], %s200
        %s202 = sand.u32 %s51, 1
        %s203 = smul.addr %s202, 256
        %s204 = scalar_lea.vmem [#allocation2], %s203
        %p205 = pneg %p64
        %p206 = pneg %p61
        %s207 = smul.u32 2, %s17
        %p208 = scmp.lt.s32.totalorder %s207, 7
        %s209 = scalar_select %p208, %s207, 7
        %s210 = smul.addr %s209, 8
        %s211 = scalar_lea.vmem %s2, %s210
        %p212 = pneg %p90
        %p213 = pneg %p87
        %p214 = pneg %p116
        %p215 = pneg %p113
        %s216 = smul.u32 2, %s17
        %p217 = scmp.lt.s32.totalorder %s216, 7
        %s218 = scalar_select %p217, %s216, 7
        %s219 = smul.addr %s218, 8
        %s220 = scalar_lea.vmem %s3, %s219
        %s221 = smul.u32 16, %s17
        %p222 = scmp.lt.s32.totalorder %s221, 63
        %s223 = scalar_select %p222, %s221, 63
        %s224 = smul.addr %s223, 8
        %s225 = scalar_lea.vmem %s0, %s224
        %s226 = smul.u32 16, %s17
        %s227 = smul.u32 16, %s17
        %s228 = smul.u32 2, %s17
        %p229 = scmp.lt.s32.totalorder %s228, 7
        %s230 = scalar_select %p229, %s228, 7
        %s231 = smul.addr %s230, 8
        %s232 = scalar_lea.vmem %s2, %s231
        %s233 = smul.u32 2, %s17
        %s234 = smul.u32 2, %s17
        %p235 = scmp.lt.s32.totalorder %s234, 7
        %s236 = scalar_select %p235, %s234, 7
        %s237 = smul.addr %s236, 8
        %s238 = scalar_lea.vmem %s3, %s237
        %s239 = smul.u32 2, %s17
        %v240 = vld [vmem:[%s225] sm:$0x1]
        %v241 = vld [vmem:[%s225 + $0x8] sm:$0x1]
        %v242 = vld [vmem:[%s225 + $0x10] sm:$0x1]
        %v243 = vld [vmem:[%s225 + $0x18] sm:$0x1]
        %v244 = vld [vmem:[%s225 + $0x20] sm:$0x1]
        %v245 = vld [vmem:[%s225 + $0x28] sm:$0x1]
        %v246 = vld [vmem:[%s225 + $0x30] sm:$0x1]
        %v247 = vld [vmem:[%s225 + $0x38] sm:$0x1]
        %v248 = vld [vmem:[%s225 + $0x40] sm:$0x1]
        %v249 = vld [vmem:[%s225 + $0x48] sm:$0x1]
        %v250 = vld [vmem:[%s225 + $0x50] sm:$0x1]
        %v251 = vld [vmem:[%s225 + $0x58] sm:$0x1]
        %v252 = vld [vmem:[%s225 + $0x60] sm:$0x1]
        %v253 = vld [vmem:[%s225 + $0x68] sm:$0x1]
        %v254 = vld [vmem:[%s225 + $0x70] sm:$0x1]
        %v255 = vld [vmem:[%s225 + $0x78] sm:$0x1]
        %v256 = vld [vmem:[%s225 + $0x1] sm:$0x1]
        %v257 = vld [vmem:[%s225 + $0x9] sm:$0x1]
        %v258 = vld [vmem:[%s225 + $0x11] sm:$0x1]
        %v259 = vld [vmem:[%s225 + $0x19] sm:$0x1]
        %v260 = vld [vmem:[%s225 + $0x21] sm:$0x1]
        %v261 = vld [vmem:[%s225 + $0x29] sm:$0x1]
        %v262 = vld [vmem:[%s225 + $0x31] sm:$0x1]
        %v263 = vld [vmem:[%s225 + $0x39] sm:$0x1]
        %v264 = vld [vmem:[%s225 + $0x41] sm:$0x1]
        %v265 = vld [vmem:[%s225 + $0x49] sm:$0x1]
        %v266 = vld [vmem:[%s225 + $0x51] sm:$0x1]
        %v267 = vld [vmem:[%s225 + $0x59] sm:$0x1]
        %v268 = vld [vmem:[%s225 + $0x61] sm:$0x1]
        %v269 = vld [vmem:[%s225 + $0x69] sm:$0x1]
        %v270 = vld [vmem:[%s225 + $0x71] sm:$0x1]
        %v271 = vld [vmem:[%s225 + $0x79] sm:$0x1]
        %v272 = vadd.f32 %v240, %v256
        %v273 = vadd.f32 %v241, %v257
        %v274 = vadd.f32 %v242, %v258
        %v275 = vadd.f32 %v243, %v259
        %v276 = vadd.f32 %v244, %v260
        %v277 = vadd.f32 %v245, %v261
        %v278 = vadd.f32 %v246, %v262
        %v279 = vadd.f32 %v247, %v263
        %v280 = vadd.f32 %v248, %v264
        %v281 = vadd.f32 %v249, %v265
        %v282 = vadd.f32 %v250, %v266
        %v283 = vadd.f32 %v251, %v267
        %v284 = vadd.f32 %v252, %v268
        %v285 = vadd.f32 %v253, %v269
        %v286 = vadd.f32 %v254, %v270
        %v287 = vadd.f32 %v255, %v271
        %v288 = vld [vmem:[%s225 + $0x2] sm:$0x1]
        %v289 = vld [vmem:[%s225 + $0xa] sm:$0x1]
        %v290 = vld [vmem:[%s225 + $0x12] sm:$0x1]
        %v291 = vld [vmem:[%s225 + $0x1a] sm:$0x1]
        %v292 = vld [vmem:[%s225 + $0x22] sm:$0x1]
        %v293 = vld [vmem:[%s225 + $0x2a] sm:$0x1]
        %v294 = vld [vmem:[%s225 + $0x32] sm:$0x1]
        %v295 = vld [vmem:[%s225 + $0x3a] sm:$0x1]
        %v296 = vld [vmem:[%s225 + $0x42] sm:$0x1]
        %v297 = vld [vmem:[%s225 + $0x4a] sm:$0x1]
        %v298 = vld [vmem:[%s225 + $0x52] sm:$0x1]
        %v299 = vld [vmem:[%s225 + $0x5a] sm:$0x1]
        %v300 = vld [vmem:[%s225 + $0x62] sm:$0x1]
        %v301 = vld [vmem:[%s225 + $0x6a] sm:$0x1]
        %v302 = vld [vmem:[%s225 + $0x72] sm:$0x1]
        %v303 = vld [vmem:[%s225 + $0x7a] sm:$0x1]
        %v304 = vadd.f32 %v272, %v288
        %v305 = vadd.f32 %v273, %v289
        %v306 = vadd.f32 %v274, %v290
        %v307 = vadd.f32 %v275, %v291
        %v308 = vadd.f32 %v276, %v292
        %v309 = vadd.f32 %v277, %v293
        %v310 = vadd.f32 %v278, %v294
        %v311 = vadd.f32 %v279, %v295
        %v312 = vadd.f32 %v280, %v296
        %v313 = vadd.f32 %v281, %v297
        %v314 = vadd.f32 %v282, %v298
        %v315 = vadd.f32 %v283, %v299
        %v316 = vadd.f32 %v284, %v300
        %v317 = vadd.f32 %v285, %v301
        %v318 = vadd.f32 %v286, %v302
        %v319 = vadd.f32 %v287, %v303
        %v320 = vld [vmem:[%s225 + $0x3] sm:$0x1]
        %v321 = vld [vmem:[%s225 + $0xb] sm:$0x1]
        %v322 = vld [vmem:[%s225 + $0x13] sm:$0x1]
        %v323 = vld [vmem:[%s225 + $0x1b] sm:$0x1]
        %v324 = vld [vmem:[%s225 + $0x23] sm:$0x1]
        %v325 = vld [vmem:[%s225 + $0x2b] sm:$0x1]
        %v326 = vld [vmem:[%s225 + $0x33] sm:$0x1]
        %v327 = vld [vmem:[%s225 + $0x3b] sm:$0x1]
        %v328 = vld [vmem:[%s225 + $0x43] sm:$0x1]
        %v329 = vld [vmem:[%s225 + $0x4b] sm:$0x1]
        %v330 = vld [vmem:[%s225 + $0x53] sm:$0x1]
        %v331 = vld [vmem:[%s225 + $0x5b] sm:$0x1]
        %v332 = vld [vmem:[%s225 + $0x63] sm:$0x1]
        %v333 = vld [vmem:[%s225 + $0x6b] sm:$0x1]
        %v334 = vld [vmem:[%s225 + $0x73] sm:$0x1]
        %v335 = vld [vmem:[%s225 + $0x7b] sm:$0x1]
        %v336 = vadd.f32 %v304, %v320
        %v337 = vadd.f32 %v305, %v321
        %v338 = vadd.f32 %v306, %v322
        %v339 = vadd.f32 %v307, %v323
        %v340 = vadd.f32 %v308, %v324
        %v341 = vadd.f32 %v309, %v325
        %v342 = vadd.f32 %v310, %v326
        %v343 = vadd.f32 %v311, %v327
        %v344 = vadd.f32 %v312, %v328
        %v345 = vadd.f32 %v313, %v329
        %v346 = vadd.f32 %v314, %v330
        %v347 = vadd.f32 %v315, %v331
        %v348 = vadd.f32 %v316, %v332
        %v349 = vadd.f32 %v317, %v333
        %v350 = vadd.f32 %v318, %v334
        %v351 = vadd.f32 %v319, %v335
        %v352 = vld [vmem:[%s225 + $0x4] sm:$0x1]
        %v353 = vld [vmem:[%s225 + $0xc] sm:$0x1]
        %v354 = vld [vmem:[%s225 + $0x14] sm:$0x1]
        %v355 = vld [vmem:[%s225 + $0x1c] sm:$0x1]
        %v356 = vld [vmem:[%s225 + $0x24] sm:$0x1]
        %v357 = vld [vmem:[%s225 + $0x2c] sm:$0x1]
        %v358 = vld [vmem:[%s225 + $0x34] sm:$0x1]
        %v359 = vld [vmem:[%s225 + $0x3c] sm:$0x1]
        %v360 = vld [vmem:[%s225 + $0x44] sm:$0x1]
        %v361 = vld [vmem:[%s225 + $0x4c] sm:$0x1]
        %v362 = vld [vmem:[%s225 + $0x54] sm:$0x1]
        %v363 = vld [vmem:[%s225 + $0x5c] sm:$0x1]
        %v364 = vld [vmem:[%s225 + $0x64] sm:$0x1]
        %v365 = vld [vmem:[%s225 + $0x6c] sm:$0x1]
        %v366 = vld [vmem:[%s225 + $0x74] sm:$0x1]
        %v367 = vld [vmem:[%s225 + $0x7c] sm:$0x1]
        %v368 = vadd.f32 %v336, %v352
        %v369 = vadd.f32 %v337, %v353
        %v370 = vadd.f32 %v338, %v354
        %v371 = vadd.f32 %v339, %v355
        %v372 = vadd.f32 %v340, %v356
        %v373 = vadd.f32 %v341, %v357
        %v374 = vadd.f32 %v342, %v358
        %v375 = vadd.f32 %v343, %v359
        %v376 = vadd.f32 %v344, %v360
        %v377 = vadd.f32 %v345, %v361
        %v378 = vadd.f32 %v346, %v362
        %v379 = vadd.f32 %v347, %v363
        %v380 = vadd.f32 %v348, %v364
        %v381 = vadd.f32 %v349, %v365
        %v382 = vadd.f32 %v350, %v366
        %v383 = vadd.f32 %v351, %v367
        %v384 = vld [vmem:[%s225 + $0x5] sm:$0x1]
        %v385 = vld [vmem:[%s225 + $0xd] sm:$0x1]
        %v386 = vld [vmem:[%s225 + $0x15] sm:$0x1]
        %v387 = vld [vmem:[%s225 + $0x1d] sm:$0x1]
        %v388 = vld [vmem:[%s225 + $0x25] sm:$0x1]
        %v389 = vld [vmem:[%s225 + $0x2d] sm:$0x1]
        %v390 = vld [vmem:[%s225 + $0x35] sm:$0x1]
        %v391 = vld [vmem:[%s225 + $0x3d] sm:$0x1]
        %v392 = vld [vmem:[%s225 + $0x45] sm:$0x1]
        %v393 = vld [vmem:[%s225 + $0x4d] sm:$0x1]
        %v394 = vld [vmem:[%s225 + $0x55] sm:$0x1]
        %v395 = vld [vmem:[%s225 + $0x5d] sm:$0x1]
        %v396 = vld [vmem:[%s225 + $0x65] sm:$0x1]
        %v397 = vld [vmem:[%s225 + $0x6d] sm:$0x1]
        %v398 = vld [vmem:[%s225 + $0x75] sm:$0x1]
        %v399 = vld [vmem:[%s225 + $0x7d] sm:$0x1]
        %v400 = vadd.f32 %v368, %v384
        %v401 = vadd.f32 %v369, %v385
        %v402 = vadd.f32 %v370, %v386
        %v403 = vadd.f32 %v371, %v387
        %v404 = vadd.f32 %v372, %v388
        %v405 = vadd.f32 %v373, %v389
        %v406 = vadd.f32 %v374, %v390
        %v407 = vadd.f32 %v375, %v391
        %v408 = vadd.f32 %v376, %v392
        %v409 = vadd.f32 %v377, %v393
        %v410 = vadd.f32 %v378, %v394
        %v411 = vadd.f32 %v379, %v395
        %v412 = vadd.f32 %v380, %v396
        %v413 = vadd.f32 %v381, %v397
        %v414 = vadd.f32 %v382, %v398
        %v415 = vadd.f32 %v383, %v399
        %v416 = vmul.f32 %v400, 0.16666667
        %v417 = vmul.f32 %v401, 0.16666667
        %v418 = vmul.f32 %v402, 0.16666667
        %v419 = vmul.f32 %v403, 0.16666667
        %v420 = vmul.f32 %v404, 0.16666667
        %v421 = vmul.f32 %v405, 0.16666667
        %v422 = vmul.f32 %v406, 0.16666667
        %v423 = vmul.f32 %v407, 0.16666667
        %v424 = vmul.f32 %v408, 0.16666667
        %v425 = vmul.f32 %v409, 0.16666667
        %v426 = vmul.f32 %v410, 0.16666667
        %v427 = vmul.f32 %v411, 0.16666667
        %v428 = vmul.f32 %v412, 0.16666667
        %v429 = vmul.f32 %v413, 0.16666667
        %v430 = vmul.f32 %v414, 0.16666667
        %v431 = vmul.f32 %v415, 0.16666667
        %v432 = vld [vmem:[%s187] sm:$0x1]
        %v433 = vld [vmem:[%s187 + $0x10] sm:$0x1]
        %v434 = vld [vmem:[%s187 + $0x20] sm:$0x1]
        %v435 = vld [vmem:[%s187 + $0x30] sm:$0x1]
        %v436 = vld [vmem:[%s187 + $0x40] sm:$0x1]
        %v437 = vld [vmem:[%s187 + $0x50] sm:$0x1]
        %v438 = vld [vmem:[%s187 + $0x60] sm:$0x1]
        %v439 = vld [vmem:[%s187 + $0x70] sm:$0x1]
        %v440 = vld [vmem:[%s187 + $0x80] sm:$0x1]
        %v441 = vld [vmem:[%s187 + $0x90] sm:$0x1]
        %v442 = vld [vmem:[%s187 + $0xa0] sm:$0x1]
        %v443 = vld [vmem:[%s187 + $0xb0] sm:$0x1]
        %v444 = vld [vmem:[%s187 + $0xc0] sm:$0x1]
        %v445 = vld [vmem:[%s187 + $0xd0] sm:$0x1]
        %v446 = vld [vmem:[%s187 + $0xe0] sm:$0x1]
        %v447 = vld [vmem:[%s187 + $0xf0] sm:$0x1]
        %v448 = vmul.f32 %v416, %v432
        %v449 = vmul.f32 %v417, %v433
        %v450 = vmul.f32 %v418, %v434
        %v451 = vmul.f32 %v419, %v435
        %v452 = vmul.f32 %v420, %v436
        %v453 = vmul.f32 %v421, %v437
        %v454 = vmul.f32 %v422, %v438
        %v455 = vmul.f32 %v423, %v439
        %v456 = vmul.f32 %v424, %v440
        %v457 = vmul.f32 %v425, %v441
        %v458 = vmul.f32 %v426, %v442
        %v459 = vmul.f32 %v427, %v443
        %v460 = vmul.f32 %v428, %v444
        %v461 = vmul.f32 %v429, %v445
        %v462 = vmul.f32 %v430, %v446
        %v463 = vmul.f32 %v431, %v447
        %v480 = vrot.slane %v449, 7
        %vm481 = vcmask 1041409
        %v482 = vsel %vm481, %v480, %v448
        %v483 = vrot.slane %v450, 6
        %vm484 = vcmask 1042434
        %v485 = vsel %vm484, %v483, %v482
        %v486 = vrot.slane %v451, 5
        %vm487 = vcmask 1043459
        %v488 = vsel %vm487, %v486, %v485
        %v489 = vrot.slane %v452, 4
        %vm490 = vcmask 1044484
        %v491 = vsel %vm490, %v489, %v488
        %v492 = vrot.slane %v453, 3
        %vm493 = vcmask 1045509
        %v494 = vsel %vm493, %v492, %v491
        %v495 = vrot.slane %v454, 2
        %vm496 = vcmask 1046534
        %v497 = vsel %vm496, %v495, %v494
        %v498 = vrot.slane %v455, 1
        %vm499 = vcmask 1047559
        %v500 = vsel %vm499, %v498, %v497
        %v501 = vrot.slane %v457, 7
        %v502 = vsel %vm481, %v501, %v456
        %v503 = vrot.slane %v458, 6
        %v504 = vsel %vm484, %v503, %v502
        %v505 = vrot.slane %v459, 5
        %v506 = vsel %vm487, %v505, %v504
        %v507 = vrot.slane %v460, 4
        %v508 = vsel %vm490, %v507, %v506
        %v509 = vrot.slane %v461, 3
        %v510 = vsel %vm493, %v509, %v508
        %v511 = vrot.slane %v462, 2
        %v512 = vsel %vm496, %v511, %v510
        %v513 = vrot.slane %v463, 1
        %v514 = vsel %vm499, %v513, %v512
        %517 = vadd.xlane.f32.xlu0 %v500
        %v518 = vpop.xlane.xlu0 %517
        %519 = vadd.xlane.f32.xlu0 %v514
        %v520 = vpop.xlane.xlu0 %519
        %v521 = vld [vmem:[%s187 + $0x1] sm:$0x1]
        %v522 = vld [vmem:[%s187 + $0x11] sm:$0x1]
        %v523 = vld [vmem:[%s187 + $0x21] sm:$0x1]
        %v524 = vld [vmem:[%s187 + $0x31] sm:$0x1]
        %v525 = vld [vmem:[%s187 + $0x41] sm:$0x1]
        %v526 = vld [vmem:[%s187 + $0x51] sm:$0x1]
        %v527 = vld [vmem:[%s187 + $0x61] sm:$0x1]
        %v528 = vld [vmem:[%s187 + $0x71] sm:$0x1]
        %v529 = vld [vmem:[%s187 + $0x81] sm:$0x1]
        %v530 = vld [vmem:[%s187 + $0x91] sm:$0x1]
        %v531 = vld [vmem:[%s187 + $0xa1] sm:$0x1]
        %v532 = vld [vmem:[%s187 + $0xb1] sm:$0x1]
        %v533 = vld [vmem:[%s187 + $0xc1] sm:$0x1]
        %v534 = vld [vmem:[%s187 + $0xd1] sm:$0x1]
        %v535 = vld [vmem:[%s187 + $0xe1] sm:$0x1]
        %v536 = vld [vmem:[%s187 + $0xf1] sm:$0x1]
        %v537 = vmul.f32 %v416, %v521
        %v538 = vmul.f32 %v417, %v522
        %v539 = vmul.f32 %v418, %v523
        %v540 = vmul.f32 %v419, %v524
        %v541 = vmul.f32 %v420, %v525
        %v542 = vmul.f32 %v421, %v526
        %v543 = vmul.f32 %v422, %v527
        %v544 = vmul.f32 %v423, %v528
        %v545 = vmul.f32 %v424, %v529
        %v546 = vmul.f32 %v425, %v530
        %v547 = vmul.f32 %v426, %v531
        %v548 = vmul.f32 %v427, %v532
        %v549 = vmul.f32 %v428, %v533
        %v550 = vmul.f32 %v429, %v534
        %v551 = vmul.f32 %v430, %v535
        %v552 = vmul.f32 %v431, %v536
        %v569 = vrot.slane %v538, 7
        %v570 = vsel %vm481, %v569, %v537
        %v571 = vrot.slane %v539, 6
        %v572 = vsel %vm484, %v571, %v570
        %v573 = vrot.slane %v540, 5
        %v574 = vsel %vm487, %v573, %v572
        %v575 = vrot.slane %v541, 4
        %v576 = vsel %vm490, %v575, %v574
        %v577 = vrot.slane %v542, 3
        %v578 = vsel %vm493, %v577, %v576
        %v579 = vrot.slane %v543, 2
        %v580 = vsel %vm496, %v579, %v578
        %v581 = vrot.slane %v544, 1
        %v582 = vsel %vm499, %v581, %v580
        %v583 = vrot.slane %v546, 7
        %v584 = vsel %vm481, %v583, %v545
        %v585 = vrot.slane %v547, 6
        %v586 = vsel %vm484, %v585, %v584
        %v587 = vrot.slane %v548, 5
        %v588 = vsel %vm487, %v587, %v586
        %v589 = vrot.slane %v549, 4
        %v590 = vsel %vm490, %v589, %v588
        %v591 = vrot.slane %v550, 3
        %v592 = vsel %vm493, %v591, %v590
        %v593 = vrot.slane %v551, 2
        %v594 = vsel %vm496, %v593, %v592
        %v595 = vrot.slane %v552, 1
        %v596 = vsel %vm499, %v595, %v594
        %599 = vadd.xlane.f32.xlu0 %v582
        %v600 = vpop.xlane.xlu0 %599
        %601 = vadd.xlane.f32.xlu0 %v596
        %v602 = vpop.xlane.xlu0 %601
        %v603 = vld [vmem:[%s187 + $0x2] sm:$0x1]
        %v604 = vld [vmem:[%s187 + $0x12] sm:$0x1]
        %v605 = vld [vmem:[%s187 + $0x22] sm:$0x1]
        %v606 = vld [vmem:[%s187 + $0x32] sm:$0x1]
        %v607 = vld [vmem:[%s187 + $0x42] sm:$0x1]
        %v608 = vld [vmem:[%s187 + $0x52] sm:$0x1]
        %v609 = vld [vmem:[%s187 + $0x62] sm:$0x1]
        %v610 = vld [vmem:[%s187 + $0x72] sm:$0x1]
        %v611 = vld [vmem:[%s187 + $0x82] sm:$0x1]
        %v612 = vld [vmem:[%s187 + $0x92] sm:$0x1]
        %v613 = vld [vmem:[%s187 + $0xa2] sm:$0x1]
        %v614 = vld [vmem:[%s187 + $0xb2] sm:$0x1]
        %v615 = vld [vmem:[%s187 + $0xc2] sm:$0x1]
        %v616 = vld [vmem:[%s187 + $0xd2] sm:$0x1]
        %v617 = vld [vmem:[%s187 + $0xe2] sm:$0x1]
        %v618 = vld [vmem:[%s187 + $0xf2] sm:$0x1]
        %v619 = vmul.f32 %v416, %v603
        %v620 = vmul.f32 %v417, %v604
        %v621 = vmul.f32 %v418, %v605
        %v622 = vmul.f32 %v419, %v606
        %v623 = vmul.f32 %v420, %v607
        %v624 = vmul.f32 %v421, %v608
        %v625 = vmul.f32 %v422, %v609
        %v626 = vmul.f32 %v423, %v610
        %v627 = vmul.f32 %v424, %v611
        %v628 = vmul.f32 %v425, %v612
        %v629 = vmul.f32 %v426, %v613
        %v630 = vmul.f32 %v427, %v614
        %v631 = vmul.f32 %v428, %v615
        %v632 = vmul.f32 %v429, %v616
        %v633 = vmul.f32 %v430, %v617
        %v634 = vmul.f32 %v431, %v618
        %v651 = vrot.slane %v620, 7
        %v652 = vsel %vm481, %v651, %v619
        %v653 = vrot.slane %v621, 6
        %v654 = vsel %vm484, %v653, %v652
        %v655 = vrot.slane %v622, 5
        %v656 = vsel %vm487, %v655, %v654
        %v657 = vrot.slane %v623, 4
        %v658 = vsel %vm490, %v657, %v656
        %v659 = vrot.slane %v624, 3
        %v660 = vsel %vm493, %v659, %v658
        %v661 = vrot.slane %v625, 2
        %v662 = vsel %vm496, %v661, %v660
        %v663 = vrot.slane %v626, 1
        %v664 = vsel %vm499, %v663, %v662
        %v665 = vrot.slane %v628, 7
        %v666 = vsel %vm481, %v665, %v627
        %v667 = vrot.slane %v629, 6
        %v668 = vsel %vm484, %v667, %v666
        %v669 = vrot.slane %v630, 5
        %v670 = vsel %vm487, %v669, %v668
        %v671 = vrot.slane %v631, 4
        %v672 = vsel %vm490, %v671, %v670
        %v673 = vrot.slane %v632, 3
        %v674 = vsel %vm493, %v673, %v672
        %v675 = vrot.slane %v633, 2
        %v676 = vsel %vm496, %v675, %v674
        %v677 = vrot.slane %v634, 1
        %v678 = vsel %vm499, %v677, %v676
        %681 = vadd.xlane.f32.xlu0 %v664
        %v682 = vpop.xlane.xlu0 %681
        %683 = vadd.xlane.f32.xlu0 %v678
        %v684 = vpop.xlane.xlu0 %683
        %v685 = vld [vmem:[%s187 + $0x3] sm:$0x1]
        %v686 = vld [vmem:[%s187 + $0x13] sm:$0x1]
        %v687 = vld [vmem:[%s187 + $0x23] sm:$0x1]
        %v688 = vld [vmem:[%s187 + $0x33] sm:$0x1]
        %v689 = vld [vmem:[%s187 + $0x43] sm:$0x1]
        %v690 = vld [vmem:[%s187 + $0x53] sm:$0x1]
        %v691 = vld [vmem:[%s187 + $0x63] sm:$0x1]
        %v692 = vld [vmem:[%s187 + $0x73] sm:$0x1]
        %v693 = vld [vmem:[%s187 + $0x83] sm:$0x1]
        %v694 = vld [vmem:[%s187 + $0x93] sm:$0x1]
        %v695 = vld [vmem:[%s187 + $0xa3] sm:$0x1]
        %v696 = vld [vmem:[%s187 + $0xb3] sm:$0x1]
        %v697 = vld [vmem:[%s187 + $0xc3] sm:$0x1]
        %v698 = vld [vmem:[%s187 + $0xd3] sm:$0x1]
        %v699 = vld [vmem:[%s187 + $0xe3] sm:$0x1]
        %v700 = vld [vmem:[%s187 + $0xf3] sm:$0x1]
        %v701 = vmul.f32 %v416, %v685
        %v702 = vmul.f32 %v417, %v686
        %v703 = vmul.f32 %v418, %v687
        %v704 = vmul.f32 %v419, %v688
        %v705 = vmul.f32 %v420, %v689
        %v706 = vmul.f32 %v421, %v690
        %v707 = vmul.f32 %v422, %v691
        %v708 = vmul.f32 %v423, %v692
        %v709 = vmul.f32 %v424, %v693
        %v710 = vmul.f32 %v425, %v694
        %v711 = vmul.f32 %v426, %v695
        %v712 = vmul.f32 %v427, %v696
        %v713 = vmul.f32 %v428, %v697
        %v714 = vmul.f32 %v429, %v698
        %v715 = vmul.f32 %v430, %v699
        %v716 = vmul.f32 %v431, %v700
        %v733 = vrot.slane %v702, 7
        %v734 = vsel %vm481, %v733, %v701
        %v735 = vrot.slane %v703, 6
        %v736 = vsel %vm484, %v735, %v734
        %v737 = vrot.slane %v704, 5
        %v738 = vsel %vm487, %v737, %v736
        %v739 = vrot.slane %v705, 4
        %v740 = vsel %vm490, %v739, %v738
        %v741 = vrot.slane %v706, 3
        %v742 = vsel %vm493, %v741, %v740
        %v743 = vrot.slane %v707, 2
        %v744 = vsel %vm496, %v743, %v742
        %v745 = vrot.slane %v708, 1
        %v746 = vsel %vm499, %v745, %v744
        %v747 = vrot.slane %v710, 7
        %v748 = vsel %vm481, %v747, %v709
        %v749 = vrot.slane %v711, 6
        %v750 = vsel %vm484, %v749, %v748
        %v751 = vrot.slane %v712, 5
        %v752 = vsel %vm487, %v751, %v750
        %v753 = vrot.slane %v713, 4
        %v754 = vsel %vm490, %v753, %v752
        %v755 = vrot.slane %v714, 3
        %v756 = vsel %vm493, %v755, %v754
        %v757 = vrot.slane %v715, 2
        %v758 = vsel %vm496, %v757, %v756
        %v759 = vrot.slane %v716, 1
        %v760 = vsel %vm499, %v759, %v758
        %763 = vadd.xlane.f32.xlu0 %v746
        %v764 = vpop.xlane.xlu0 %763
        %765 = vadd.xlane.f32.xlu0 %v760
        %v766 = vpop.xlane.xlu0 %765
        %v767 = vld [vmem:[%s187 + $0x4] sm:$0x1]
        %v768 = vld [vmem:[%s187 + $0x14] sm:$0x1]
        %v769 = vld [vmem:[%s187 + $0x24] sm:$0x1]
        %v770 = vld [vmem:[%s187 + $0x34] sm:$0x1]
        %v771 = vld [vmem:[%s187 + $0x44] sm:$0x1]
        %v772 = vld [vmem:[%s187 + $0x54] sm:$0x1]
        %v773 = vld [vmem:[%s187 + $0x64] sm:$0x1]
        %v774 = vld [vmem:[%s187 + $0x74] sm:$0x1]
        %v775 = vld [vmem:[%s187 + $0x84] sm:$0x1]
        %v776 = vld [vmem:[%s187 + $0x94] sm:$0x1]
        %v777 = vld [vmem:[%s187 + $0xa4] sm:$0x1]
        %v778 = vld [vmem:[%s187 + $0xb4] sm:$0x1]
        %v779 = vld [vmem:[%s187 + $0xc4] sm:$0x1]
        %v780 = vld [vmem:[%s187 + $0xd4] sm:$0x1]
        %v781 = vld [vmem:[%s187 + $0xe4] sm:$0x1]
        %v782 = vld [vmem:[%s187 + $0xf4] sm:$0x1]
        %v783 = vmul.f32 %v416, %v767
        %v784 = vmul.f32 %v417, %v768
        %v785 = vmul.f32 %v418, %v769
        %v786 = vmul.f32 %v419, %v770
        %v787 = vmul.f32 %v420, %v771
        %v788 = vmul.f32 %v421, %v772
        %v789 = vmul.f32 %v422, %v773
        %v790 = vmul.f32 %v423, %v774
        %v791 = vmul.f32 %v424, %v775
        %v792 = vmul.f32 %v425, %v776
        %v793 = vmul.f32 %v426, %v777
        %v794 = vmul.f32 %v427, %v778
        %v795 = vmul.f32 %v428, %v779
        %v796 = vmul.f32 %v429, %v780
        %v797 = vmul.f32 %v430, %v781
        %v798 = vmul.f32 %v431, %v782
        %v815 = vrot.slane %v784, 7
        %v816 = vsel %vm481, %v815, %v783
        %v817 = vrot.slane %v785, 6
        %v818 = vsel %vm484, %v817, %v816
        %v819 = vrot.slane %v786, 5
        %v820 = vsel %vm487, %v819, %v818
        %v821 = vrot.slane %v787, 4
        %v822 = vsel %vm490, %v821, %v820
        %v823 = vrot.slane %v788, 3
        %v824 = vsel %vm493, %v823, %v822
        %v825 = vrot.slane %v789, 2
        %v826 = vsel %vm496, %v825, %v824
        %v827 = vrot.slane %v790, 1
        %v828 = vsel %vm499, %v827, %v826
        %v829 = vrot.slane %v792, 7
        %v830 = vsel %vm481, %v829, %v791
        %v831 = vrot.slane %v793, 6
        %v832 = vsel %vm484, %v831, %v830
        %v833 = vrot.slane %v794, 5
        %v834 = vsel %vm487, %v833, %v832
        %v835 = vrot.slane %v795, 4
        %v836 = vsel %vm490, %v835, %v834
        %v837 = vrot.slane %v796, 3
        %v838 = vsel %vm493, %v837, %v836
        %v839 = vrot.slane %v797, 2
        %v840 = vsel %vm496, %v839, %v838
        %v841 = vrot.slane %v798, 1
        %v842 = vsel %vm499, %v841, %v840
        %845 = vadd.xlane.f32.xlu0 %v828
        %v846 = vpop.xlane.xlu0 %845
        %847 = vadd.xlane.f32.xlu0 %v842
        %v848 = vpop.xlane.xlu0 %847
        %v849 = vld [vmem:[%s187 + $0x5] sm:$0x1]
        %v850 = vld [vmem:[%s187 + $0x15] sm:$0x1]
        %v851 = vld [vmem:[%s187 + $0x25] sm:$0x1]
        %v852 = vld [vmem:[%s187 + $0x35] sm:$0x1]
        %v853 = vld [vmem:[%s187 + $0x45] sm:$0x1]
        %v854 = vld [vmem:[%s187 + $0x55] sm:$0x1]
        %v855 = vld [vmem:[%s187 + $0x65] sm:$0x1]
        %v856 = vld [vmem:[%s187 + $0x75] sm:$0x1]
        %v857 = vld [vmem:[%s187 + $0x85] sm:$0x1]
        %v858 = vld [vmem:[%s187 + $0x95] sm:$0x1]
        %v859 = vld [vmem:[%s187 + $0xa5] sm:$0x1]
        %v860 = vld [vmem:[%s187 + $0xb5] sm:$0x1]
        %v861 = vld [vmem:[%s187 + $0xc5] sm:$0x1]
        %v862 = vld [vmem:[%s187 + $0xd5] sm:$0x1]
        %v863 = vld [vmem:[%s187 + $0xe5] sm:$0x1]
        %v864 = vld [vmem:[%s187 + $0xf5] sm:$0x1]
        %v865 = vmul.f32 %v416, %v849
        %v866 = vmul.f32 %v417, %v850
        %v867 = vmul.f32 %v418, %v851
        %v868 = vmul.f32 %v419, %v852
        %v869 = vmul.f32 %v420, %v853
        %v870 = vmul.f32 %v421, %v854
        %v871 = vmul.f32 %v422, %v855
        %v872 = vmul.f32 %v423, %v856
        %v873 = vmul.f32 %v424, %v857
        %v874 = vmul.f32 %v425, %v858
        %v875 = vmul.f32 %v426, %v859
        %v876 = vmul.f32 %v427, %v860
        %v877 = vmul.f32 %v428, %v861
        %v878 = vmul.f32 %v429, %v862
        %v879 = vmul.f32 %v430, %v863
        %v880 = vmul.f32 %v431, %v864
        %v897 = vrot.slane %v866, 7
        %v898 = vsel %vm481, %v897, %v865
        %v899 = vrot.slane %v867, 6
        %v900 = vsel %vm484, %v899, %v898
        %v901 = vrot.slane %v868, 5
        %v902 = vsel %vm487, %v901, %v900
        %v903 = vrot.slane %v869, 4
        %v904 = vsel %vm490, %v903, %v902
        %v905 = vrot.slane %v870, 3
        %v906 = vsel %vm493, %v905, %v904
        %v907 = vrot.slane %v871, 2
        %v908 = vsel %vm496, %v907, %v906
        %v909 = vrot.slane %v872, 1
        %v910 = vsel %vm499, %v909, %v908
        %v911 = vrot.slane %v874, 7
        %v912 = vsel %vm481, %v911, %v873
        %v913 = vrot.slane %v875, 6
        %v914 = vsel %vm484, %v913, %v912
        %v915 = vrot.slane %v876, 5
        %v916 = vsel %vm487, %v915, %v914
        %v917 = vrot.slane %v877, 4
        %v918 = vsel %vm490, %v917, %v916
        %v919 = vrot.slane %v878, 3
        %v920 = vsel %vm493, %v919, %v918
        %v921 = vrot.slane %v879, 2
        %v922 = vsel %vm496, %v921, %v920
        %v923 = vrot.slane %v880, 1
        %v924 = vsel %vm499, %v923, %v922
        %927 = vadd.xlane.f32.xlu0 %v910
        %v928 = vpop.xlane.xlu0 %927
        %929 = vadd.xlane.f32.xlu0 %v924
        %v930 = vpop.xlane.xlu0 %929
        %v931 = vld [vmem:[%s187 + $0x6] sm:$0x1]
        %v932 = vld [vmem:[%s187 + $0x16] sm:$0x1]
        %v933 = vld [vmem:[%s187 + $0x26] sm:$0x1]
        %v934 = vld [vmem:[%s187 + $0x36] sm:$0x1]
        %v935 = vld [vmem:[%s187 + $0x46] sm:$0x1]
        %v936 = vld [vmem:[%s187 + $0x56] sm:$0x1]
        %v937 = vld [vmem:[%s187 + $0x66] sm:$0x1]
        %v938 = vld [vmem:[%s187 + $0x76] sm:$0x1]
        %v939 = vld [vmem:[%s187 + $0x86] sm:$0x1]
        %v940 = vld [vmem:[%s187 + $0x96] sm:$0x1]
        %v941 = vld [vmem:[%s187 + $0xa6] sm:$0x1]
        %v942 = vld [vmem:[%s187 + $0xb6] sm:$0x1]
        %v943 = vld [vmem:[%s187 + $0xc6] sm:$0x1]
        %v944 = vld [vmem:[%s187 + $0xd6] sm:$0x1]
        %v945 = vld [vmem:[%s187 + $0xe6] sm:$0x1]
        %v946 = vld [vmem:[%s187 + $0xf6] sm:$0x1]
        %v947 = vmul.f32 %v416, %v931
        %v948 = vmul.f32 %v417, %v932
        %v949 = vmul.f32 %v418, %v933
        %v950 = vmul.f32 %v419, %v934
        %v951 = vmul.f32 %v420, %v935
        %v952 = vmul.f32 %v421, %v936
        %v953 = vmul.f32 %v422, %v937
        %v954 = vmul.f32 %v423, %v938
        %v955 = vmul.f32 %v424, %v939
        %v956 = vmul.f32 %v425, %v940
        %v957 = vmul.f32 %v426, %v941
        %v958 = vmul.f32 %v427, %v942
        %v959 = vmul.f32 %v428, %v943
        %v960 = vmul.f32 %v429, %v944
        %v961 = vmul.f32 %v430, %v945
        %v962 = vmul.f32 %v431, %v946
        %v979 = vrot.slane %v948, 7
        %v980 = vsel %vm481, %v979, %v947
        %v981 = vrot.slane %v949, 6
        %v982 = vsel %vm484, %v981, %v980
        %v983 = vrot.slane %v950, 5
        %v984 = vsel %vm487, %v983, %v982
        %v985 = vrot.slane %v951, 4
        %v986 = vsel %vm490, %v985, %v984
        %v987 = vrot.slane %v952, 3
        %v988 = vsel %vm493, %v987, %v986
        %v989 = vrot.slane %v953, 2
        %v990 = vsel %vm496, %v989, %v988
        %v991 = vrot.slane %v954, 1
        %v992 = vsel %vm499, %v991, %v990
        %v993 = vrot.slane %v956, 7
        %v994 = vsel %vm481, %v993, %v955
        %v995 = vrot.slane %v957, 6
        %v996 = vsel %vm484, %v995, %v994
        %v997 = vrot.slane %v958, 5
        %v998 = vsel %vm487, %v997, %v996
        %v999 = vrot.slane %v959, 4
        %v1000 = vsel %vm490, %v999, %v998
        %v1001 = vrot.slane %v960, 3
        %v1002 = vsel %vm493, %v1001, %v1000
        %v1003 = vrot.slane %v961, 2
        %v1004 = vsel %vm496, %v1003, %v1002
        %v1005 = vrot.slane %v962, 1
        %v1006 = vsel %vm499, %v1005, %v1004
        %1009 = vadd.xlane.f32.xlu0 %v992
        %v1010 = vpop.xlane.xlu0 %1009
        %1011 = vadd.xlane.f32.xlu0 %v1006
        %v1012 = vpop.xlane.xlu0 %1011
        %v1013 = vld [vmem:[%s187 + $0x7] sm:$0x1]
        %v1014 = vld [vmem:[%s187 + $0x17] sm:$0x1]
        %v1015 = vld [vmem:[%s187 + $0x27] sm:$0x1]
        %v1016 = vld [vmem:[%s187 + $0x37] sm:$0x1]
        %v1017 = vld [vmem:[%s187 + $0x47] sm:$0x1]
        %v1018 = vld [vmem:[%s187 + $0x57] sm:$0x1]
        %v1019 = vld [vmem:[%s187 + $0x67] sm:$0x1]
        %v1020 = vld [vmem:[%s187 + $0x77] sm:$0x1]
        %v1021 = vld [vmem:[%s187 + $0x87] sm:$0x1]
        %v1022 = vld [vmem:[%s187 + $0x97] sm:$0x1]
        %v1023 = vld [vmem:[%s187 + $0xa7] sm:$0x1]
        %v1024 = vld [vmem:[%s187 + $0xb7] sm:$0x1]
        %v1025 = vld [vmem:[%s187 + $0xc7] sm:$0x1]
        %v1026 = vld [vmem:[%s187 + $0xd7] sm:$0x1]
        %v1027 = vld [vmem:[%s187 + $0xe7] sm:$0x1]
        %v1028 = vld [vmem:[%s187 + $0xf7] sm:$0x1]
        %v1029 = vmul.f32 %v416, %v1013
        %v1030 = vmul.f32 %v417, %v1014
        %v1031 = vmul.f32 %v418, %v1015
        %v1032 = vmul.f32 %v419, %v1016
        %v1033 = vmul.f32 %v420, %v1017
        %v1034 = vmul.f32 %v421, %v1018
        %v1035 = vmul.f32 %v422, %v1019
        %v1036 = vmul.f32 %v423, %v1020
        %v1037 = vmul.f32 %v424, %v1021
        %v1038 = vmul.f32 %v425, %v1022
        %v1039 = vmul.f32 %v426, %v1023
        %v1040 = vmul.f32 %v427, %v1024
        %v1041 = vmul.f32 %v428, %v1025
        %v1042 = vmul.f32 %v429, %v1026
        %v1043 = vmul.f32 %v430, %v1027
        %v1044 = vmul.f32 %v431, %v1028
        %v1061 = vrot.slane %v1030, 7
        %v1062 = vsel %vm481, %v1061, %v1029
        %v1063 = vrot.slane %v1031, 6
        %v1064 = vsel %vm484, %v1063, %v1062
        %v1065 = vrot.slane %v1032, 5
        %v1066 = vsel %vm487, %v1065, %v1064
        %v1067 = vrot.slane %v1033, 4
        %v1068 = vsel %vm490, %v1067, %v1066
        %v1069 = vrot.slane %v1034, 3
        %v1070 = vsel %vm493, %v1069, %v1068
        %v1071 = vrot.slane %v1035, 2
        %v1072 = vsel %vm496, %v1071, %v1070
        %v1073 = vrot.slane %v1036, 1
        %v1074 = vsel %vm499, %v1073, %v1072
        %v1075 = vrot.slane %v1038, 7
        %v1076 = vsel %vm481, %v1075, %v1037
        %v1077 = vrot.slane %v1039, 6
        %v1078 = vsel %vm484, %v1077, %v1076
        %v1079 = vrot.slane %v1040, 5
        %v1080 = vsel %vm487, %v1079, %v1078
        %v1081 = vrot.slane %v1041, 4
        %v1082 = vsel %vm490, %v1081, %v1080
        %v1083 = vrot.slane %v1042, 3
        %v1084 = vsel %vm493, %v1083, %v1082
        %v1085 = vrot.slane %v1043, 2
        %v1086 = vsel %vm496, %v1085, %v1084
        %v1087 = vrot.slane %v1044, 1
        %v1088 = vsel %vm499, %v1087, %v1086
        %1091 = vadd.xlane.f32.xlu0 %v1074
        %v1092 = vpop.xlane.xlu0 %1091
        %1093 = vadd.xlane.f32.xlu0 %v1088
        %v1094 = vpop.xlane.xlu0 %1093
        %v1095 = vld [vmem:[%s187 + $0x8] sm:$0x1]
        %v1096 = vld [vmem:[%s187 + $0x18] sm:$0x1]
        %v1097 = vld [vmem:[%s187 + $0x28] sm:$0x1]
        %v1098 = vld [vmem:[%s187 + $0x38] sm:$0x1]
        %v1099 = vld [vmem:[%s187 + $0x48] sm:$0x1]
        %v1100 = vld [vmem:[%s187 + $0x58] sm:$0x1]
        %v1101 = vld [vmem:[%s187 + $0x68] sm:$0x1]
        %v1102 = vld [vmem:[%s187 + $0x78] sm:$0x1]
        %v1103 = vld [vmem:[%s187 + $0x88] sm:$0x1]
        %v1104 = vld [vmem:[%s187 + $0x98] sm:$0x1]
        %v1105 = vld [vmem:[%s187 + $0xa8] sm:$0x1]
        %v1106 = vld [vmem:[%s187 + $0xb8] sm:$0x1]
        %v1107 = vld [vmem:[%s187 + $0xc8] sm:$0x1]
        %v1108 = vld [vmem:[%s187 + $0xd8] sm:$0x1]
        %v1109 = vld [vmem:[%s187 + $0xe8] sm:$0x1]
        %v1110 = vld [vmem:[%s187 + $0xf8] sm:$0x1]
        %v1111 = vmul.f32 %v416, %v1095
        %v1112 = vmul.f32 %v417, %v1096
        %v1113 = vmul.f32 %v418, %v1097
        %v1114 = vmul.f32 %v419, %v1098
        %v1115 = vmul.f32 %v420, %v1099
        %v1116 = vmul.f32 %v421, %v1100
        %v1117 = vmul.f32 %v422, %v1101
        %v1118 = vmul.f32 %v423, %v1102
        %v1119 = vmul.f32 %v424, %v1103
        %v1120 = vmul.f32 %v425, %v1104
        %v1121 = vmul.f32 %v426, %v1105
        %v1122 = vmul.f32 %v427, %v1106
        %v1123 = vmul.f32 %v428, %v1107
        %v1124 = vmul.f32 %v429, %v1108
        %v1125 = vmul.f32 %v430, %v1109
        %v1126 = vmul.f32 %v431, %v1110
        %v1143 = vrot.slane %v1112, 7
        %v1144 = vsel %vm481, %v1143, %v1111
        %v1145 = vrot.slane %v1113, 6
        %v1146 = vsel %vm484, %v1145, %v1144
        %v1147 = vrot.slane %v1114, 5
        %v1148 = vsel %vm487, %v1147, %v1146
        %v1149 = vrot.slane %v1115, 4
        %v1150 = vsel %vm490, %v1149, %v1148
        %v1151 = vrot.slane %v1116, 3
        %v1152 = vsel %vm493, %v1151, %v1150
        %v1153 = vrot.slane %v1117, 2
        %v1154 = vsel %vm496, %v1153, %v1152
        %v1155 = vrot.slane %v1118, 1
        %v1156 = vsel %vm499, %v1155, %v1154
        %v1157 = vrot.slane %v1120, 7
        %v1158 = vsel %vm481, %v1157, %v1119
        %v1159 = vrot.slane %v1121, 6
        %v1160 = vsel %vm484, %v1159, %v1158
        %v1161 = vrot.slane %v1122, 5
        %v1162 = vsel %vm487, %v1161, %v1160
        %v1163 = vrot.slane %v1123, 4
        %v1164 = vsel %vm490, %v1163, %v1162
        %v1165 = vrot.slane %v1124, 3
        %v1166 = vsel %vm493, %v1165, %v1164
        %v1167 = vrot.slane %v1125, 2
        %v1168 = vsel %vm496, %v1167, %v1166
        %v1169 = vrot.slane %v1126, 1
        %v1170 = vsel %vm499, %v1169, %v1168
        %1173 = vadd.xlane.f32.xlu0 %v1156
        %v1174 = vpop.xlane.xlu0 %1173
        %1175 = vadd.xlane.f32.xlu0 %v1170
        %v1176 = vpop.xlane.xlu0 %1175
        %v1177 = vld [vmem:[%s187 + $0x9] sm:$0x1]
        %v1178 = vld [vmem:[%s187 + $0x19] sm:$0x1]
        %v1179 = vld [vmem:[%s187 + $0x29] sm:$0x1]
        %v1180 = vld [vmem:[%s187 + $0x39] sm:$0x1]
        %v1181 = vld [vmem:[%s187 + $0x49] sm:$0x1]
        %v1182 = vld [vmem:[%s187 + $0x59] sm:$0x1]
        %v1183 = vld [vmem:[%s187 + $0x69] sm:$0x1]
        %v1184 = vld [vmem:[%s187 + $0x79] sm:$0x1]
        %v1185 = vld [vmem:[%s187 + $0x89] sm:$0x1]
        %v1186 = vld [vmem:[%s187 + $0x99] sm:$0x1]
        %v1187 = vld [vmem:[%s187 + $0xa9] sm:$0x1]
        %v1188 = vld [vmem:[%s187 + $0xb9] sm:$0x1]
        %v1189 = vld [vmem:[%s187 + $0xc9] sm:$0x1]
        %v1190 = vld [vmem:[%s187 + $0xd9] sm:$0x1]
        %v1191 = vld [vmem:[%s187 + $0xe9] sm:$0x1]
        %v1192 = vld [vmem:[%s187 + $0xf9] sm:$0x1]
        %v1193 = vmul.f32 %v416, %v1177
        %v1194 = vmul.f32 %v417, %v1178
        %v1195 = vmul.f32 %v418, %v1179
        %v1196 = vmul.f32 %v419, %v1180
        %v1197 = vmul.f32 %v420, %v1181
        %v1198 = vmul.f32 %v421, %v1182
        %v1199 = vmul.f32 %v422, %v1183
        %v1200 = vmul.f32 %v423, %v1184
        %v1201 = vmul.f32 %v424, %v1185
        %v1202 = vmul.f32 %v425, %v1186
        %v1203 = vmul.f32 %v426, %v1187
        %v1204 = vmul.f32 %v427, %v1188
        %v1205 = vmul.f32 %v428, %v1189
        %v1206 = vmul.f32 %v429, %v1190
        %v1207 = vmul.f32 %v430, %v1191
        %v1208 = vmul.f32 %v431, %v1192
        %v1225 = vrot.slane %v1194, 7
        %v1226 = vsel %vm481, %v1225, %v1193
        %v1227 = vrot.slane %v1195, 6
        %v1228 = vsel %vm484, %v1227, %v1226
        %v1229 = vrot.slane %v1196, 5
        %v1230 = vsel %vm487, %v1229, %v1228
        %v1231 = vrot.slane %v1197, 4
        %v1232 = vsel %vm490, %v1231, %v1230
        %v1233 = vrot.slane %v1198, 3
        %v1234 = vsel %vm493, %v1233, %v1232
        %v1235 = vrot.slane %v1199, 2
        %v1236 = vsel %vm496, %v1235, %v1234
        %v1237 = vrot.slane %v1200, 1
        %v1238 = vsel %vm499, %v1237, %v1236
        %v1239 = vrot.slane %v1202, 7
        %v1240 = vsel %vm481, %v1239, %v1201
        %v1241 = vrot.slane %v1203, 6
        %v1242 = vsel %vm484, %v1241, %v1240
        %v1243 = vrot.slane %v1204, 5
        %v1244 = vsel %vm487, %v1243, %v1242
        %v1245 = vrot.slane %v1205, 4
        %v1246 = vsel %vm490, %v1245, %v1244
        %v1247 = vrot.slane %v1206, 3
        %v1248 = vsel %vm493, %v1247, %v1246
        %v1249 = vrot.slane %v1207, 2
        %v1250 = vsel %vm496, %v1249, %v1248
        %v1251 = vrot.slane %v1208, 1
        %v1252 = vsel %vm499, %v1251, %v1250
        %1255 = vadd.xlane.f32.xlu0 %v1238
        %v1256 = vpop.xlane.xlu0 %1255
        %1257 = vadd.xlane.f32.xlu0 %v1252
        %v1258 = vpop.xlane.xlu0 %1257
        %v1259 = vld [vmem:[%s187 + $0xa] sm:$0x1]
        %v1260 = vld [vmem:[%s187 + $0x1a] sm:$0x1]
        %v1261 = vld [vmem:[%s187 + $0x2a] sm:$0x1]
        %v1262 = vld [vmem:[%s187 + $0x3a] sm:$0x1]
        %v1263 = vld [vmem:[%s187 + $0x4a] sm:$0x1]
        %v1264 = vld [vmem:[%s187 + $0x5a] sm:$0x1]
        %v1265 = vld [vmem:[%s187 + $0x6a] sm:$0x1]
        %v1266 = vld [vmem:[%s187 + $0x7a] sm:$0x1]
        %v1267 = vld [vmem:[%s187 + $0x8a] sm:$0x1]
        %v1268 = vld [vmem:[%s187 + $0x9a] sm:$0x1]
        %v1269 = vld [vmem:[%s187 + $0xaa] sm:$0x1]
        %v1270 = vld [vmem:[%s187 + $0xba] sm:$0x1]
        %v1271 = vld [vmem:[%s187 + $0xca] sm:$0x1]
        %v1272 = vld [vmem:[%s187 + $0xda] sm:$0x1]
        %v1273 = vld [vmem:[%s187 + $0xea] sm:$0x1]
        %v1274 = vld [vmem:[%s187 + $0xfa] sm:$0x1]
        %v1275 = vmul.f32 %v416, %v1259
        %v1276 = vmul.f32 %v417, %v1260
        %v1277 = vmul.f32 %v418, %v1261
        %v1278 = vmul.f32 %v419, %v1262
        %v1279 = vmul.f32 %v420, %v1263
        %v1280 = vmul.f32 %v421, %v1264
        %v1281 = vmul.f32 %v422, %v1265
        %v1282 = vmul.f32 %v423, %v1266
        %v1283 = vmul.f32 %v424, %v1267
        %v1284 = vmul.f32 %v425, %v1268
        %v1285 = vmul.f32 %v426, %v1269
        %v1286 = vmul.f32 %v427, %v1270
        %v1287 = vmul.f32 %v428, %v1271
        %v1288 = vmul.f32 %v429, %v1272
        %v1289 = vmul.f32 %v430, %v1273
        %v1290 = vmul.f32 %v431, %v1274
        %v1307 = vrot.slane %v1276, 7
        %v1308 = vsel %vm481, %v1307, %v1275
        %v1309 = vrot.slane %v1277, 6
        %v1310 = vsel %vm484, %v1309, %v1308
        %v1311 = vrot.slane %v1278, 5
        %v1312 = vsel %vm487, %v1311, %v1310
        %v1313 = vrot.slane %v1279, 4
        %v1314 = vsel %vm490, %v1313, %v1312
        %v1315 = vrot.slane %v1280, 3
        %v1316 = vsel %vm493, %v1315, %v1314
        %v1317 = vrot.slane %v1281, 2
        %v1318 = vsel %vm496, %v1317, %v1316
        %v1319 = vrot.slane %v1282, 1
        %v1320 = vsel %vm499, %v1319, %v1318
        %v1321 = vrot.slane %v1284, 7
        %v1322 = vsel %vm481, %v1321, %v1283
        %v1323 = vrot.slane %v1285, 6
        %v1324 = vsel %vm484, %v1323, %v1322
        %v1325 = vrot.slane %v1286, 5
        %v1326 = vsel %vm487, %v1325, %v1324
        %v1327 = vrot.slane %v1287, 4
        %v1328 = vsel %vm490, %v1327, %v1326
        %v1329 = vrot.slane %v1288, 3
        %v1330 = vsel %vm493, %v1329, %v1328
        %v1331 = vrot.slane %v1289, 2
        %v1332 = vsel %vm496, %v1331, %v1330
        %v1333 = vrot.slane %v1290, 1
        %v1334 = vsel %vm499, %v1333, %v1332
        %1337 = vadd.xlane.f32.xlu0 %v1320
        %v1338 = vpop.xlane.xlu0 %1337
        %1339 = vadd.xlane.f32.xlu0 %v1334
        %v1340 = vpop.xlane.xlu0 %1339
        %v1341 = vld [vmem:[%s187 + $0xb] sm:$0x1]
        %v1342 = vld [vmem:[%s187 + $0x1b] sm:$0x1]
        %v1343 = vld [vmem:[%s187 + $0x2b] sm:$0x1]
        %v1344 = vld [vmem:[%s187 + $0x3b] sm:$0x1]
        %v1345 = vld [vmem:[%s187 + $0x4b] sm:$0x1]
        %v1346 = vld [vmem:[%s187 + $0x5b] sm:$0x1]
        %v1347 = vld [vmem:[%s187 + $0x6b] sm:$0x1]
        %v1348 = vld [vmem:[%s187 + $0x7b] sm:$0x1]
        %v1349 = vld [vmem:[%s187 + $0x8b] sm:$0x1]
        %v1350 = vld [vmem:[%s187 + $0x9b] sm:$0x1]
        %v1351 = vld [vmem:[%s187 + $0xab] sm:$0x1]
        %v1352 = vld [vmem:[%s187 + $0xbb] sm:$0x1]
        %v1353 = vld [vmem:[%s187 + $0xcb] sm:$0x1]
        %v1354 = vld [vmem:[%s187 + $0xdb] sm:$0x1]
        %v1355 = vld [vmem:[%s187 + $0xeb] sm:$0x1]
        %v1356 = vld [vmem:[%s187 + $0xfb] sm:$0x1]
        %v1357 = vmul.f32 %v416, %v1341
        %v1358 = vmul.f32 %v417, %v1342
        %v1359 = vmul.f32 %v418, %v1343
        %v1360 = vmul.f32 %v419, %v1344
        %v1361 = vmul.f32 %v420, %v1345
        %v1362 = vmul.f32 %v421, %v1346
        %v1363 = vmul.f32 %v422, %v1347
        %v1364 = vmul.f32 %v423, %v1348
        %v1365 = vmul.f32 %v424, %v1349
        %v1366 = vmul.f32 %v425, %v1350
        %v1367 = vmul.f32 %v426, %v1351
        %v1368 = vmul.f32 %v427, %v1352
        %v1369 = vmul.f32 %v428, %v1353
        %v1370 = vmul.f32 %v429, %v1354
        %v1371 = vmul.f32 %v430, %v1355
        %v1372 = vmul.f32 %v431, %v1356
        %v1389 = vrot.slane %v1358, 7
        %v1390 = vsel %vm481, %v1389, %v1357
        %v1391 = vrot.slane %v1359, 6
        %v1392 = vsel %vm484, %v1391, %v1390
        %v1393 = vrot.slane %v1360, 5
        %v1394 = vsel %vm487, %v1393, %v1392
        %v1395 = vrot.slane %v1361, 4
        %v1396 = vsel %vm490, %v1395, %v1394
        %v1397 = vrot.slane %v1362, 3
        %v1398 = vsel %vm493, %v1397, %v1396
        %v1399 = vrot.slane %v1363, 2
        %v1400 = vsel %vm496, %v1399, %v1398
        %v1401 = vrot.slane %v1364, 1
        %v1402 = vsel %vm499, %v1401, %v1400
        %v1403 = vrot.slane %v1366, 7
        %v1404 = vsel %vm481, %v1403, %v1365
        %v1405 = vrot.slane %v1367, 6
        %v1406 = vsel %vm484, %v1405, %v1404
        %v1407 = vrot.slane %v1368, 5
        %v1408 = vsel %vm487, %v1407, %v1406
        %v1409 = vrot.slane %v1369, 4
        %v1410 = vsel %vm490, %v1409, %v1408
        %v1411 = vrot.slane %v1370, 3
        %v1412 = vsel %vm493, %v1411, %v1410
        %v1413 = vrot.slane %v1371, 2
        %v1414 = vsel %vm496, %v1413, %v1412
        %v1415 = vrot.slane %v1372, 1
        %v1416 = vsel %vm499, %v1415, %v1414
        %1419 = vadd.xlane.f32.xlu0 %v1402
        %v1420 = vpop.xlane.xlu0 %1419
        %1421 = vadd.xlane.f32.xlu0 %v1416
        %v1422 = vpop.xlane.xlu0 %1421
        %v1423 = vld [vmem:[%s187 + $0xc] sm:$0x1]
        %v1424 = vld [vmem:[%s187 + $0x1c] sm:$0x1]
        %v1425 = vld [vmem:[%s187 + $0x2c] sm:$0x1]
        %v1426 = vld [vmem:[%s187 + $0x3c] sm:$0x1]
        %v1427 = vld [vmem:[%s187 + $0x4c] sm:$0x1]
        %v1428 = vld [vmem:[%s187 + $0x5c] sm:$0x1]
        %v1429 = vld [vmem:[%s187 + $0x6c] sm:$0x1]
        %v1430 = vld [vmem:[%s187 + $0x7c] sm:$0x1]
        %v1431 = vld [vmem:[%s187 + $0x8c] sm:$0x1]
        %v1432 = vld [vmem:[%s187 + $0x9c] sm:$0x1]
        %v1433 = vld [vmem:[%s187 + $0xac] sm:$0x1]
        %v1434 = vld [vmem:[%s187 + $0xbc] sm:$0x1]
        %v1435 = vld [vmem:[%s187 + $0xcc] sm:$0x1]
        %v1436 = vld [vmem:[%s187 + $0xdc] sm:$0x1]
        %v1437 = vld [vmem:[%s187 + $0xec] sm:$0x1]
        %v1438 = vld [vmem:[%s187 + $0xfc] sm:$0x1]
        %v1439 = vmul.f32 %v416, %v1423
        %v1440 = vmul.f32 %v417, %v1424
        %v1441 = vmul.f32 %v418, %v1425
        %v1442 = vmul.f32 %v419, %v1426
        %v1443 = vmul.f32 %v420, %v1427
        %v1444 = vmul.f32 %v421, %v1428
        %v1445 = vmul.f32 %v422, %v1429
        %v1446 = vmul.f32 %v423, %v1430
        %v1447 = vmul.f32 %v424, %v1431
        %v1448 = vmul.f32 %v425, %v1432
        %v1449 = vmul.f32 %v426, %v1433
        %v1450 = vmul.f32 %v427, %v1434
        %v1451 = vmul.f32 %v428, %v1435
        %v1452 = vmul.f32 %v429, %v1436
        %v1453 = vmul.f32 %v430, %v1437
        %v1454 = vmul.f32 %v431, %v1438
        %v1471 = vrot.slane %v1440, 7
        %v1472 = vsel %vm481, %v1471, %v1439
        %v1473 = vrot.slane %v1441, 6
        %v1474 = vsel %vm484, %v1473, %v1472
        %v1475 = vrot.slane %v1442, 5
        %v1476 = vsel %vm487, %v1475, %v1474
        %v1477 = vrot.slane %v1443, 4
        %v1478 = vsel %vm490, %v1477, %v1476
        %v1479 = vrot.slane %v1444, 3
        %v1480 = vsel %vm493, %v1479, %v1478
        %v1481 = vrot.slane %v1445, 2
        %v1482 = vsel %vm496, %v1481, %v1480
        %v1483 = vrot.slane %v1446, 1
        %v1484 = vsel %vm499, %v1483, %v1482
        %v1485 = vrot.slane %v1448, 7
        %v1486 = vsel %vm481, %v1485, %v1447
        %v1487 = vrot.slane %v1449, 6
        %v1488 = vsel %vm484, %v1487, %v1486
        %v1489 = vrot.slane %v1450, 5
        %v1490 = vsel %vm487, %v1489, %v1488
        %v1491 = vrot.slane %v1451, 4
        %v1492 = vsel %vm490, %v1491, %v1490
        %v1493 = vrot.slane %v1452, 3
        %v1494 = vsel %vm493, %v1493, %v1492
        %v1495 = vrot.slane %v1453, 2
        %v1496 = vsel %vm496, %v1495, %v1494
        %v1497 = vrot.slane %v1454, 1
        %v1498 = vsel %vm499, %v1497, %v1496
        %1501 = vadd.xlane.f32.xlu0 %v1484
        %v1502 = vpop.xlane.xlu0 %1501
        %1503 = vadd.xlane.f32.xlu0 %v1498
        %v1504 = vpop.xlane.xlu0 %1503
        %v1505 = vld [vmem:[%s187 + $0xd] sm:$0x1]
        %v1506 = vld [vmem:[%s187 + $0x1d] sm:$0x1]
        %v1507 = vld [vmem:[%s187 + $0x2d] sm:$0x1]
        %v1508 = vld [vmem:[%s187 + $0x3d] sm:$0x1]
        %v1509 = vld [vmem:[%s187 + $0x4d] sm:$0x1]
        %v1510 = vld [vmem:[%s187 + $0x5d] sm:$0x1]
        %v1511 = vld [vmem:[%s187 + $0x6d] sm:$0x1]
        %v1512 = vld [vmem:[%s187 + $0x7d] sm:$0x1]
        %v1513 = vld [vmem:[%s187 + $0x8d] sm:$0x1]
        %v1514 = vld [vmem:[%s187 + $0x9d] sm:$0x1]
        %v1515 = vld [vmem:[%s187 + $0xad] sm:$0x1]
        %v1516 = vld [vmem:[%s187 + $0xbd] sm:$0x1]
        %v1517 = vld [vmem:[%s187 + $0xcd] sm:$0x1]
        %v1518 = vld [vmem:[%s187 + $0xdd] sm:$0x1]
        %v1519 = vld [vmem:[%s187 + $0xed] sm:$0x1]
        %v1520 = vld [vmem:[%s187 + $0xfd] sm:$0x1]
        %v1521 = vmul.f32 %v416, %v1505
        %v1522 = vmul.f32 %v417, %v1506
        %v1523 = vmul.f32 %v418, %v1507
        %v1524 = vmul.f32 %v419, %v1508
        %v1525 = vmul.f32 %v420, %v1509
        %v1526 = vmul.f32 %v421, %v1510
        %v1527 = vmul.f32 %v422, %v1511
        %v1528 = vmul.f32 %v423, %v1512
        %v1529 = vmul.f32 %v424, %v1513
        %v1530 = vmul.f32 %v425, %v1514
        %v1531 = vmul.f32 %v426, %v1515
        %v1532 = vmul.f32 %v427, %v1516
        %v1533 = vmul.f32 %v428, %v1517
        %v1534 = vmul.f32 %v429, %v1518
        %v1535 = vmul.f32 %v430, %v1519
        %v1536 = vmul.f32 %v431, %v1520
        %v1553 = vrot.slane %v1522, 7
        %v1554 = vsel %vm481, %v1553, %v1521
        %v1555 = vrot.slane %v1523, 6
        %v1556 = vsel %vm484, %v1555, %v1554
        %v1557 = vrot.slane %v1524, 5
        %v1558 = vsel %vm487, %v1557, %v1556
        %v1559 = vrot.slane %v1525, 4
        %v1560 = vsel %vm490, %v1559, %v1558
        %v1561 = vrot.slane %v1526, 3
        %v1562 = vsel %vm493, %v1561, %v1560
        %v1563 = vrot.slane %v1527, 2
        %v1564 = vsel %vm496, %v1563, %v1562
        %v1565 = vrot.slane %v1528, 1
        %v1566 = vsel %vm499, %v1565, %v1564
        %v1567 = vrot.slane %v1530, 7
        %v1568 = vsel %vm481, %v1567, %v1529
        %v1569 = vrot.slane %v1531, 6
        %v1570 = vsel %vm484, %v1569, %v1568
        %v1571 = vrot.slane %v1532, 5
        %v1572 = vsel %vm487, %v1571, %v1570
        %v1573 = vrot.slane %v1533, 4
        %v1574 = vsel %vm490, %v1573, %v1572
        %v1575 = vrot.slane %v1534, 3
        %v1576 = vsel %vm493, %v1575, %v1574
        %v1577 = vrot.slane %v1535, 2
        %v1578 = vsel %vm496, %v1577, %v1576
        %v1579 = vrot.slane %v1536, 1
        %v1580 = vsel %vm499, %v1579, %v1578
        %1583 = vadd.xlane.f32.xlu0 %v1566
        %v1584 = vpop.xlane.xlu0 %1583
        %1585 = vadd.xlane.f32.xlu0 %v1580
        %v1586 = vpop.xlane.xlu0 %1585
        %v1587 = vld [vmem:[%s187 + $0xe] sm:$0x1]
        %v1588 = vld [vmem:[%s187 + $0x1e] sm:$0x1]
        %v1589 = vld [vmem:[%s187 + $0x2e] sm:$0x1]
        %v1590 = vld [vmem:[%s187 + $0x3e] sm:$0x1]
        %v1591 = vld [vmem:[%s187 + $0x4e] sm:$0x1]
        %v1592 = vld [vmem:[%s187 + $0x5e] sm:$0x1]
        %v1593 = vld [vmem:[%s187 + $0x6e] sm:$0x1]
        %v1594 = vld [vmem:[%s187 + $0x7e] sm:$0x1]
        %v1595 = vld [vmem:[%s187 + $0x8e] sm:$0x1]
        %v1596 = vld [vmem:[%s187 + $0x9e] sm:$0x1]
        %v1597 = vld [vmem:[%s187 + $0xae] sm:$0x1]
        %v1598 = vld [vmem:[%s187 + $0xbe] sm:$0x1]
        %v1599 = vld [vmem:[%s187 + $0xce] sm:$0x1]
        %v1600 = vld [vmem:[%s187 + $0xde] sm:$0x1]
        %v1601 = vld [vmem:[%s187 + $0xee] sm:$0x1]
        %v1602 = vld [vmem:[%s187 + $0xfe] sm:$0x1]
        %v1603 = vmul.f32 %v416, %v1587
        %v1604 = vmul.f32 %v417, %v1588
        %v1605 = vmul.f32 %v418, %v1589
        %v1606 = vmul.f32 %v419, %v1590
        %v1607 = vmul.f32 %v420, %v1591
        %v1608 = vmul.f32 %v421, %v1592
        %v1609 = vmul.f32 %v422, %v1593
        %v1610 = vmul.f32 %v423, %v1594
        %v1611 = vmul.f32 %v424, %v1595
        %v1612 = vmul.f32 %v425, %v1596
        %v1613 = vmul.f32 %v426, %v1597
        %v1614 = vmul.f32 %v427, %v1598
        %v1615 = vmul.f32 %v428, %v1599
        %v1616 = vmul.f32 %v429, %v1600
        %v1617 = vmul.f32 %v430, %v1601
        %v1618 = vmul.f32 %v431, %v1602
        %v1635 = vrot.slane %v1604, 7
        %v1636 = vsel %vm481, %v1635, %v1603
        %v1637 = vrot.slane %v1605, 6
        %v1638 = vsel %vm484, %v1637, %v1636
        %v1639 = vrot.slane %v1606, 5
        %v1640 = vsel %vm487, %v1639, %v1638
        %v1641 = vrot.slane %v1607, 4
        %v1642 = vsel %vm490, %v1641, %v1640
        %v1643 = vrot.slane %v1608, 3
        %v1644 = vsel %vm493, %v1643, %v1642
        %v1645 = vrot.slane %v1609, 2
        %v1646 = vsel %vm496, %v1645, %v1644
        %v1647 = vrot.slane %v1610, 1
        %v1648 = vsel %vm499, %v1647, %v1646
        %v1649 = vrot.slane %v1612, 7
        %v1650 = vsel %vm481, %v1649, %v1611
        %v1651 = vrot.slane %v1613, 6
        %v1652 = vsel %vm484, %v1651, %v1650
        %v1653 = vrot.slane %v1614, 5
        %v1654 = vsel %vm487, %v1653, %v1652
        %v1655 = vrot.slane %v1615, 4
        %v1656 = vsel %vm490, %v1655, %v1654
        %v1657 = vrot.slane %v1616, 3
        %v1658 = vsel %vm493, %v1657, %v1656
        %v1659 = vrot.slane %v1617, 2
        %v1660 = vsel %vm496, %v1659, %v1658
        %v1661 = vrot.slane %v1618, 1
        %v1662 = vsel %vm499, %v1661, %v1660
        %1665 = vadd.xlane.f32.xlu0 %v1648
        %v1666 = vpop.xlane.xlu0 %1665
        %1667 = vadd.xlane.f32.xlu0 %v1662
        %v1668 = vpop.xlane.xlu0 %1667
        %v1669 = vld [vmem:[%s187 + $0xf] sm:$0x1]
        %v1670 = vld [vmem:[%s187 + $0x1f] sm:$0x1]
        %v1671 = vld [vmem:[%s187 + $0x2f] sm:$0x1]
        %v1672 = vld [vmem:[%s187 + $0x3f] sm:$0x1]
        %v1673 = vld [vmem:[%s187 + $0x4f] sm:$0x1]
        %v1674 = vld [vmem:[%s187 + $0x5f] sm:$0x1]
        %v1675 = vld [vmem:[%s187 + $0x6f] sm:$0x1]
        %v1676 = vld [vmem:[%s187 + $0x7f] sm:$0x1]
        %v1677 = vld [vmem:[%s187 + $0x8f] sm:$0x1]
        %v1678 = vld [vmem:[%s187 + $0x9f] sm:$0x1]
        %v1679 = vld [vmem:[%s187 + $0xaf] sm:$0x1]
        %v1680 = vld [vmem:[%s187 + $0xbf] sm:$0x1]
        %v1681 = vld [vmem:[%s187 + $0xcf] sm:$0x1]
        %v1682 = vld [vmem:[%s187 + $0xdf] sm:$0x1]
        %v1683 = vld [vmem:[%s187 + $0xef] sm:$0x1]
        %v1684 = vld [vmem:[%s187 + $0xff] sm:$0x1]
        %v1685 = vmul.f32 %v416, %v1669
        %v1686 = vmul.f32 %v417, %v1670
        %v1687 = vmul.f32 %v418, %v1671
        %v1688 = vmul.f32 %v419, %v1672
        %v1689 = vmul.f32 %v420, %v1673
        %v1690 = vmul.f32 %v421, %v1674
        %v1691 = vmul.f32 %v422, %v1675
        %v1692 = vmul.f32 %v423, %v1676
        %v1693 = vmul.f32 %v424, %v1677
        %v1694 = vmul.f32 %v425, %v1678
        %v1695 = vmul.f32 %v426, %v1679
        %v1696 = vmul.f32 %v427, %v1680
        %v1697 = vmul.f32 %v428, %v1681
        %v1698 = vmul.f32 %v429, %v1682
        %v1699 = vmul.f32 %v430, %v1683
        %v1700 = vmul.f32 %v431, %v1684
        %v1717 = vrot.slane %v1686, 7
        %v1718 = vsel %vm481, %v1717, %v1685
        %v1719 = vrot.slane %v1687, 6
        %v1720 = vsel %vm484, %v1719, %v1718
        %v1721 = vrot.slane %v1688, 5
        %v1722 = vsel %vm487, %v1721, %v1720
        %v1723 = vrot.slane %v1689, 4
        %v1724 = vsel %vm490, %v1723, %v1722
        %v1725 = vrot.slane %v1690, 3
        %v1726 = vsel %vm493, %v1725, %v1724
        %v1727 = vrot.slane %v1691, 2
        %v1728 = vsel %vm496, %v1727, %v1726
        %v1729 = vrot.slane %v1692, 1
        %v1730 = vsel %vm499, %v1729, %v1728
        %v1731 = vrot.slane %v1694, 7
        %v1732 = vsel %vm481, %v1731, %v1693
        %v1733 = vrot.slane %v1695, 6
        %v1734 = vsel %vm484, %v1733, %v1732
        %v1735 = vrot.slane %v1696, 5
        %v1736 = vsel %vm487, %v1735, %v1734
        %v1737 = vrot.slane %v1697, 4
        %v1738 = vsel %vm490, %v1737, %v1736
        %v1739 = vrot.slane %v1698, 3
        %v1740 = vsel %vm493, %v1739, %v1738
        %v1741 = vrot.slane %v1699, 2
        %v1742 = vsel %vm496, %v1741, %v1740
        %v1743 = vrot.slane %v1700, 1
        %v1744 = vsel %vm499, %v1743, %v1742
        %1747 = vadd.xlane.f32.xlu0 %v1730
        %v1748 = vpop.xlane.xlu0 %1747
        %1749 = vadd.xlane.f32.xlu0 %v1744
        %v1750 = vpop.xlane.xlu0 %1749
        %vm1751 = vcmask 7168
        %v1752 = vsel %vm1751, %v518, %v600
        %v1753 = vsel %vm1751, %v520, %v602
        %vm1754 = vcmask 15360
        %v1755 = vsel %vm1754, %v1752, %v682
        %v1756 = vsel %vm1754, %v1753, %v684
        %vm1757 = vcmask 23552
        %v1758 = vsel %vm1757, %v1755, %v764
        %v1759 = vsel %vm1757, %v1756, %v766
        %vm1760 = vcmask 31744
        %v1761 = vsel %vm1760, %v1758, %v846
        %v1762 = vsel %vm1760, %v1759, %v848
        %vm1763 = vcmask 39936
        %v1764 = vsel %vm1763, %v1761, %v928
        %v1765 = vsel %vm1763, %v1762, %v930
        %vm1766 = vcmask 48128
        %v1767 = vsel %vm1766, %v1764, %v1010
        %v1768 = vsel %vm1766, %v1765, %v1012
        %vm1769 = vcmask 56320
        %v1770 = vsel %vm1769, %v1767, %v1092
        %v1771 = vsel %vm1769, %v1768, %v1094
        %vm1772 = vcmask 64512
        %v1773 = vsel %vm1772, %v1770, %v1174
        %v1774 = vsel %vm1772, %v1771, %v1176
        %vm1775 = vcmask 72704
        %v1776 = vsel %vm1775, %v1773, %v1256
        %v1777 = vsel %vm1775, %v1774, %v1258
        %vm1778 = vcmask 80896
        %v1779 = vsel %vm1778, %v1776, %v1338
        %v1780 = vsel %vm1778, %v1777, %v1340
        %vm1781 = vcmask 89088
        %v1782 = vsel %vm1781, %v1779, %v1420
        %v1783 = vsel %vm1781, %v1780, %v1422
        %vm1784 = vcmask 97280
        %v1785 = vsel %vm1784, %v1782, %v1502
        %v1786 = vsel %vm1784, %v1783, %v1504
        %vm1787 = vcmask 105472
        %v1788 = vsel %vm1787, %v1785, %v1584
        %v1789 = vsel %vm1787, %v1786, %v1586
        %vm1790 = vcmask 113664
        %v1791 = vsel %vm1790, %v1788, %v1666
        %v1792 = vsel %vm1790, %v1789, %v1668
        %vm1793 = vcmask 121856
        %v1794 = vsel %vm1793, %v1791, %v1748
        %v1795 = vsel %vm1793, %v1792, %v1750
        %v1796 = vld [vmem:[%s232] sm:$0xff]
        %v1797 = vld [vmem:[%s232 + $0x8] sm:$0xff]
        %vm1798 = vcmp.ne.s32.totalorder %v1796, 0
        %vm1799 = vcmp.ne.s32.totalorder %v1797, 0
        %v1800 = vsel %vm1798, -1e+30, %v1794
        %v1801 = vsel %vm1799, -1e+30, %v1795
        %v1802 = vmul.f32 %v1800, 2.0
        %v1803 = vmul.f32 %v1801, 2.0
        %vm1804 = vcmask 130048
        %v1805 = vsel %vm1804, %v1802, -inf
        %1806 = vmax.xlane.f32.xlu0 %v1805
        %v1807 = vpop.xlane.xlu0 %1806
        %v1808 = vsel %vm1804, %v1803, -inf
        %1809 = vmax.xlane.f32.xlu0 %v1808
        %v1810 = vpop.xlane.xlu0 %1809
        %v1811 = vsub.f32 %v1802, %v1807
        %v1812 = vsub.f32 %v1803, %v1810
        %v1813 = vmul.f32 %v1811, 1.442695
        %v1814 = vpow.pop %v1813
        %v1815 = vmul.f32 %v1812, 1.442695
        %v1816 = vpow.pop %v1815
        %v1817 = vsel %vm1804, %v1814, 0.0
        %1818 = vadd.xlane.f32.xlu0 %v1817
        %v1819 = vpop.xlane.xlu0 %1818
        %v1820 = vsel %vm1804, %v1816, 0.0
        %1821 = vadd.xlane.f32.xlu0 %v1820
        %v1822 = vpop.xlane.xlu0 %1821
        %v1823 = vrcp.pop %v1819
        %v1824 = vmul.f32 %v1819, %v1823
        %v1825 = vsub.f32 1.0, %v1824
        %v1826 = vmul.f32 %v1823, %v1825
        %v1827 = vadd.f32 %v1823, %v1826
        %vm1828 = vweird.f32 %v1819
        %vm1829 = vweird.f32 %v1823
        %vm1830 = vmor %vm1828, %vm1829
        %v1831 = vsel %vm1830, %v1823, %v1827
        %v1832 = vand.u32 2147483647, %v1819
        %vm1833 = vcmp.eq.f32.partialorder %v1832, 8.507059e+37
        %v1834 = vand.u32 %v1819, 2147483648
        %v1835 = vor.u32 1.1754944e-38, %v1834
        %v1836 = vsel %vm1833, %v1835, %v1831
        %v1837 = vmul.f32 %v1814, %v1836
        %v1838 = vrcp.pop %v1822
        %v1839 = vmul.f32 %v1822, %v1838
        %v1840 = vsub.f32 1.0, %v1839
        %v1841 = vmul.f32 %v1838, %v1840
        %v1842 = vadd.f32 %v1838, %v1841
        %vm1843 = vweird.f32 %v1822
        %vm1844 = vweird.f32 %v1838
        %vm1845 = vmor %vm1843, %vm1844
        %v1846 = vsel %vm1845, %v1838, %v1842
        %v1847 = vand.u32 2147483647, %v1822
        %vm1848 = vcmp.eq.f32.partialorder %v1847, 8.507059e+37
        %v1849 = vand.u32 %v1822, 2147483648
        %v1850 = vor.u32 1.1754944e-38, %v1849
        %v1851 = vsel %vm1848, %v1850, %v1846
        %v1852 = vmul.f32 %v1816, %v1851
        %1853 = vst.msk [vmem:[%s238] sm:$0xff] %vm1804, %v1837
        %1854 = vst.msk [vmem:[%s238 + $0x8] sm:$0xff] %vm1804, %v1852
        %s1855 = smul.u32 2, %s17
        %p1856 = scmp.lt.s32.totalorder %s1855, 7
        %s1857 = scalar_select %p1856, %s1855, 7
        %s1858 = smul.addr %s1857, 8
        %s1859 = scalar_lea.vmem %s3, %s1858
        // Predicated region
        $region37: #{tpu_custom_call.1} parent=31 // pred_check
          %p1860 = pneg %p113
        $region38: #{tpu_custom_call.1} parent=31 // pred_check_branch
          %1862 = sbr.rel (%p1860) target = $region40
        $region39: #{tpu_custom_call.1} parent=31 // pred_region
          %s1863 = smul.u32 2, %s17
        $region40: #{tpu_custom_call.1} parent=31 // pred_fallthru
          _
      $region32: #{tpu_custom_call.1} parent=5 // pred_fallthru
        _
      %p1864 = scmp.le.s32.totalorder 2, %s12
      // Predicated region
      $region41: #{tpu_custom_call.1} parent=5 // pred_check
        %p1865 = pneg %p1864
      $region42: #{tpu_custom_call.1} parent=5 // pred_check_branch
        %1867 = sbr.rel (%p1865) target = $region44
      $region43: #{tpu_custom_call.1} parent=5 // pred_region
        %s1868 = ssub.s32 %s12, 2
        // Predicated region
        $region45: #{tpu_custom_call.1} parent=43 // pred_check
          %p1869 = pneg %p119
        $region46: #{tpu_custom_call.1} parent=43 // pred_check_branch
          %1871 = sbr.rel (%p1869) target = $region48
        $region47: #{tpu_custom_call.1} parent=43 // pred_region
          %s1872 = smul.u32 2, %s18
          %p1873 = scmp.lt.s32.totalorder %s1872, 7
          %s1874 = scalar_select %p1873, %s1872, 7
          %s1875 = smul.addr %s1874, 8
          %s1876 = scalar_lea.vmem %s3, %s1875
        $region48: #{tpu_custom_call.1} parent=43 // pred_fallthru
          _
      $region44: #{tpu_custom_call.1} parent=5 // pred_fallthru
        _
    $region6: #{tpu_custom_call.1} parent=1 // loop_footer
      %s16 = sadd.s32 1, %s12
    $region7: #{tpu_custom_call.1} parent=1 // loop_footer_branch
      %11 = sbr.rel target = $region3
    $region8: #{tpu_custom_call.1} parent=1 // loop_exit
      _
    %1877 = vsyncpa [#allocation3], 1
    %s1878 = scalar_lea.sflag [#allocation3], 1
    %1879 = vsyncpa %s1878, 1

</llo_original>
